<compile_context>
chip_gen: v5e
topology: v5e:2x2
jax: 0.10.0
libtpu: 0.0.40
codegen_flags: <defaults>
</compile_context>

<pallas_src>
import jax
import jax.numpy as jnp
from jax.experimental import pallas as pl
from jax.experimental.pallas import tpu as pltpu


# ---------------------------------------------------------------------------
# Pallas kernel 1: fused conv-bias + InstanceNorm3d(affine=False) + ReLU
# ---------------------------------------------------------------------------

def _inorm_bias_relu_kernel(x_ref, b_ref, o_ref):
    # x_ref: (br, L) -- rows are (n, c) instances, lanes are flattened spatial
    #        (lane-dense: L is a multiple of 128 in practice).
    # b_ref: (br, 1)  -- per-row conv bias (cancelled by the mean subtraction,
    #        kept for faithfulness; it is free here).
    x = x_ref[...].astype(jnp.float32) + b_ref[...]
    mean = jnp.mean(x, axis=-1, keepdims=True)
    var = jnp.mean(jnp.square(x - mean), axis=-1, keepdims=True)
    y = (x - mean) * jax.lax.rsqrt(var + 1e-5)
    o_ref[...] = jnp.maximum(y, 0.0).astype(o_ref.dtype)


def instance_norm_relu(x, bias):
    """InstanceNorm3d(affine=False, eps=1e-5) + ReLU on NCDHW input, with the
    preceding conv's bias folded in.  Rows = N*C, lanes = D*H*W."""
    N, C, D, H, W = x.shape
    rows, L = N * C, D * H * W
    xr = x.reshape(rows, L).astype(jnp.float32)   # contiguous merge: free reshape
    brows = jnp.tile(bias.astype(jnp.float32), N).reshape(rows, 1)

    # Row tile: prefer >=16 rows per block and >=2 grid blocks.
    rows_p = ((rows + 7) // 8) * 8
    br = next((c for c in (64, 32, 16, 8) if rows_p % c == 0 and rows_p // c >= 2),
              None)
    if br is None:
        br = next(c for c in (64, 32, 16, 8) if rows_p % c == 0)
    if rows_p != rows:
        xr = jnp.pad(xr, ((0, rows_p - rows), (0, 0)))
        brows = jnp.pad(brows, ((0, rows_p - rows), (0, 0)))

    # TODO(synk): for very large L, tile the spatial axis with a streaming /
    # two-pass mean-var instead of a single (br, L) block.
    out = pl.pallas_call(
        _inorm_bias_relu_kernel,
        out_shape=jax.ShapeDtypeStruct((rows_p, L), jnp.float32),
        grid=(rows_p // br,),
        in_specs=[
            pl.BlockSpec((br, L), lambda i: (i, 0)),
            pl.BlockSpec((br, 1), lambda i: (i, 0)),
        ],
        out_specs=pl.BlockSpec((br, L), lambda i: (i, 0)),
        compiler_params=pltpu.CompilerParams(
            dimension_semantics=("parallel",)),
    )(xr, brows)
    return out[:rows].reshape(N, C, D, H, W)


# ---------------------------------------------------------------------------
# Pallas kernel 2: fully fused PAM (projections + attention + residual)
# ---------------------------------------------------------------------------

def _make_pam_kernel(c8: int, c: int):
    """Fused PAM for one batch element, entirely in VMEM and spatial-major
    (L, C) layout.  The PyTorch permutes/bmm-transposes become dot_general
    contraction choices, so no operand is ever explicitly transposed."""

    def kernel(gamma_ref, x_ref, wq_ref, wk_ref, wv_ref,
               bq_ref, bk_ref, bv_ref, o_ref):
        x = x_ref[0].astype(jnp.float32)                                  # (L, C)
        # Fused 1x1x1 q/k/v projections: x is read from HBM exactly once.
        q = jax.lax.dot_general(x, wq_ref[...], (((1,), (1,)), ((), ())),
                                preferred_element_type=jnp.float32) + bq_ref[...]
        k = jax.lax.dot_general(x, wk_ref[...], (((1,), (1,)), ((), ())),
                                preferred_element_type=jnp.float32) + bk_ref[...]
        v = jax.lax.dot_general(x, wv_ref[...], (((1,), (1,)), ((), ())),
                                preferred_element_type=jnp.float32) + bv_ref[...]
        # energy[i, j] = q_i . k_j  (== bmm(Q^T, K) in the PyTorch code)
        energy = jax.lax.dot_general(q, k, (((1,), (1,)), ((), ())),
                                     preferred_element_type=jnp.float32)  # (L, L)
        energy = energy - jnp.max(energy, axis=-1, keepdims=True)
        e = jnp.exp(energy)
        inv = pl.reciprocal(jnp.sum(e, axis=-1, keepdims=True), approx=True)
        attn = e * inv                                      # softmax over keys
        # out_i = sum_j attn[i, j] * v_j  (== V @ attn^T, no transpose needed)
        out = jnp.dot(attn, v, preferred_element_type=jnp.float32)        # (L, C)
        o_ref[0] = (gamma_ref[0] * out + x).astype(o_ref.dtype)

    return kernel


def pam(x, p):
    """Position attention module: one fused Pallas kernel per batch element.

    TODO(synk): for large D*H*W, switch to flash-style (tq, tk) tiling with an
    online softmax so the (L, L) energy never materializes (v7x: 64 MiB VMEM).
    """
    N, C, D, H, W = x.shape
    L = D * H * W
    c8 = p["q_w"].shape[0]
    # Spatial-major view for the kernel; x here is a small post-upsample
    # feature map, so this transpose is negligible.
    x_sm = x.reshape(N, C, L).transpose(0, 2, 1)                          # (N, L, C)
    out_sm = pl.pallas_call(
        _make_pam_kernel(c8, C),
        out_shape=jax.ShapeDtypeStruct((N, L, C), jnp.float32),
        grid=(N,),
        in_specs=[
            pl.BlockSpec(memory_space=pltpu.MemorySpace.SMEM),   # gamma (1,)
            pl.BlockSpec((1, L, C), lambda b: (b, 0, 0)),        # x (spatial-major)
            pl.BlockSpec((c8, C), lambda b: (0, 0)),             # W_q
            pl.BlockSpec((c8, C), lambda b: (0, 0)),             # W_k
            pl.BlockSpec((C, C), lambda b: (0, 0)),              # W_v
            pl.BlockSpec((1, c8), lambda b: (0, 0)),             # b_q
            pl.BlockSpec((1, c8), lambda b: (0, 0)),             # b_k
            pl.BlockSpec((1, C), lambda b: (0, 0)),              # b_v
        ],
        out_specs=pl.BlockSpec((1, L, C), lambda b: (b, 0, 0)),
        compiler_params=pltpu.CompilerParams(
            dimension_semantics=("parallel",)),
    )(p["gamma"].astype(jnp.float32), x_sm,
      p["q_w"], p["k_w"], p["v_w"],
      p["q_b"].reshape(1, c8), p["k_b"].reshape(1, c8), p["v_b"].reshape(1, C))
    return out_sm.transpose(0, 2, 1).reshape(N, C, D, H, W)


# ---------------------------------------------------------------------------
# Convolutions: XLA's native TPU conv emitter (reviewer option (b)) -- no
# im2col blow-up, no dilated-input materialization.
# TODO(synk): a fully in-Pallas conv (kvol as a reduction grid axis with
# per-tap rectangular DMA windows + f32 accumulator scratch) could replace
# lax.conv here if an end-to-end Pallas pipeline is required.
# ---------------------------------------------------------------------------

def conv3d_k3s1p1(x, w):
    """Conv3d(kernel=3, stride=1, padding=1), NCDHW x OIDHW.  Bias is folded
    into the following fused InstanceNorm+ReLU kernel."""
    return jax.lax.conv_general_dilated(
        x, w,
        window_strides=(1, 1, 1),
        padding=((1, 1), (1, 1), (1, 1)),
        dimension_numbers=("NCDHW", "OIDHW", "NCDHW"),
        preferred_element_type=jnp.float32,
    )


def conv_transpose3d_k4s2p1(x, wt):
    """ConvTranspose3d(kernel=4, stride=2, padding=1) with PyTorch weight
    layout (in_ch, out_ch, 4, 4, 4), expressed as a base-dilated forward conv
    (lhs_dilation=2, padding=k-1-p=2, spatially flipped kernel)."""
    w = jnp.flip(wt, axis=(2, 3, 4))          # still (I, O, kD, kH, kW)
    return jax.lax.conv_general_dilated(
        x, w,
        window_strides=(1, 1, 1),
        padding=((2, 2), (2, 2), (2, 2)),
        lhs_dilation=(2, 2, 2),
        dimension_numbers=("NCDHW", "IODHW", "NCDHW"),
        preferred_element_type=jnp.float32,
    )


# ---------------------------------------------------------------------------
# Full `up.forward`
# ---------------------------------------------------------------------------

def up_forward(x1, x2, p):
    # self.up(x1): ConvTranspose3d -> InstanceNorm3d -> ReLU
    y = conv_transpose3d_k4s2p1(x1, p["up_w"])
    y = instance_norm_relu(y, p["up_b"])
    # self.pam(x1)
    y = pam(y, p)
    # F.pad(x2, (dX//2, dX//2, dY//2, dY//2, dZ//2, dZ//2)) -- the PyTorch code
    # pads W with diffX (measured on dim 2), H with diffY, D with diffZ.
    diffX = y.shape[2] - x2.shape[2]
    diffY = y.shape[3] - x2.shape[3]
    diffZ = y.shape[4] - x2.shape[4]
    x2p = jnp.pad(x2, ((0, 0), (0, 0),
                       (diffZ // 2, diffZ // 2),
                       (diffY // 2, diffY // 2),
                       (diffX // 2, diffX // 2)))
    x = jnp.concatenate([x2p, y], axis=1)
    # double_conv(in_ch, out_ch): (Conv3d k3 p1 -> InstanceNorm3d -> ReLU) x 2
    x = conv3d_k3s1p1(x, p["dc1_w"])
    x = instance_norm_relu(x, p["dc1_b"])
    x = conv3d_k3s1p1(x, p["dc2_w"])
    x = instance_norm_relu(x, p["dc2_b"])
    return x


def init_params(key, in_ch, out_ch):
    ks = jax.random.split(key, 12)

    def nrm(k, shape, scale=0.1):
        return scale * jax.random.normal(k, shape, dtype=jnp.float32)

    c8 = max(out_ch // 8, 1)
    return {
        # ConvTranspose3d weight layout: (in_ch, out_ch, 4, 4, 4)
        "up_w": nrm(ks[0], (in_ch, out_ch, 4, 4, 4)),
        "up_b": nrm(ks[1], (out_ch,)),
        # PAM 1x1x1 convs, PyTorch layout squeezed: (Cout, Cin)
        "q_w": nrm(ks[2], (c8, out_ch)),
        "q_b": nrm(ks[3], (c8,)),
        "k_w": nrm(ks[4], (c8, out_ch)),
        "k_b": nrm(ks[5], (c8,)),
        "v_w": nrm(ks[6], (out_ch, out_ch)),
        "v_b": nrm(ks[7], (out_ch,)),
        # PyTorch inits gamma to 0; use a deterministic nonzero value so the
        # attention path actually contributes in this smoke test.
        "gamma": jnp.array([0.1], dtype=jnp.float32),
        # double_conv(in_ch, out_ch)
        "dc1_w": nrm(ks[8], (out_ch, in_ch, 3, 3, 3)),
        "dc1_b": nrm(ks[9], (out_ch,)),
        "dc2_w": nrm(ks[10], (out_ch, out_ch, 3, 3, 3)),
        "dc2_b": nrm(ks[11], (out_ch,)),
    }


if __name__ == "__main__":
    in_ch, out_ch = 32, 16          # classic U-Net decoder: in_ch = 2*out_ch
    N, D, H, W = 2, 2, 4, 4         # x1 spatial; x2 matches the upsampled size
    key = jax.random.PRNGKey(0)
    k1, k2, kp = jax.random.split(key, 3)
    x1 = jax.random.normal(k1, (N, in_ch, D, H, W), dtype=jnp.float32)
    x2 = jax.random.normal(k2, (N, out_ch, 2 * D, 2 * H, 2 * W), dtype=jnp.float32)
    params = init_params(kp, in_ch, out_ch)

    out = jax.jit(up_forward)(x1, x2, params)
    out = jax.block_until_ready(out)
    assert out.shape == (N, out_ch, 2 * D, 2 * H, 2 * W), out.shape
    assert bool(jnp.all(jnp.isfinite(out)))
    print("KERNEL_OK")
</pallas_src>

<mosaic_0001>
module attributes {stable_mosaic.version = 11 : i64} {
  func.func @kernel(%arg0: i32, %arg1: memref<1xf32, #tpu.memory_space<smem>>, %arg2: memref<1x256x16xf32, #tpu.memory_space<vmem>>, %arg3: memref<2x16xf32, #tpu.memory_space<vmem>>, %arg4: memref<2x16xf32, #tpu.memory_space<vmem>>, %arg5: memref<16x16xf32, #tpu.memory_space<vmem>>, %arg6: memref<1x2xf32, #tpu.memory_space<vmem>>, %arg7: memref<1x2xf32, #tpu.memory_space<vmem>>, %arg8: memref<1x16xf32, #tpu.memory_space<vmem>>, %arg9: memref<1x256x16xf32, #tpu.memory_space<vmem>>) attributes {dimension_semantics = [#tpu.dimension_semantics<parallel>], iteration_bounds = array<i64: 2>, scalar_prefetch = 0 : i64, scratch_operands = 0 : i64, tpu.core_type = #tpu.core_type<tc>, window_params = [{transform_indices = @transform_0, window_bounds = array<i64: 1>}, {transform_indices = @transform_1, window_bounds = array<i64: 1, 256, 16>}, {pipeline_mode = #tpu.pipeline_mode<synchronous>, transform_indices = @transform_2, window_bounds = array<i64: 2, 16>}, {pipeline_mode = #tpu.pipeline_mode<synchronous>, transform_indices = @transform_3, window_bounds = array<i64: 2, 16>}, {pipeline_mode = #tpu.pipeline_mode<synchronous>, transform_indices = @transform_4, window_bounds = array<i64: 16, 16>}, {pipeline_mode = #tpu.pipeline_mode<synchronous>, transform_indices = @transform_5, window_bounds = array<i64: 1, 2>}, {pipeline_mode = #tpu.pipeline_mode<synchronous>, transform_indices = @transform_6, window_bounds = array<i64: 1, 2>}, {pipeline_mode = #tpu.pipeline_mode<synchronous>, transform_indices = @transform_7, window_bounds = array<i64: 1, 16>}, {transform_indices = @transform_8, window_bounds = array<i64: 1, 256, 16>}]} {
    %c0 = arith.constant 0 : index
    %c0_0 = arith.constant 0 : index
    %c0_1 = arith.constant 0 : index
    %0 = vector.load %arg2[%c0, %c0_0, %c0_1] : memref<1x256x16xf32, #tpu.memory_space<vmem>>, vector<1x256x16xf32>
    %1 = vector.shape_cast %0 : vector<1x256x16xf32> to vector<256x16xf32>
    %c0_2 = arith.constant 0 : index
    %c0_3 = arith.constant 0 : index
    %2 = vector.load %arg3[%c0_2, %c0_3] : memref<2x16xf32, #tpu.memory_space<vmem>>, vector<2x16xf32>
    %cst = arith.constant dense<0.000000e+00> : vector<256x2xf32>
    %3 = tpu.matmul %1, %2, %cst {dimension_numbers = #tpu.dot_dimension_numbers<[1], [1], [0], [0], [0, 0, 1, 0], [], []>} : vector<256x16xf32>, vector<2x16xf32>, vector<256x2xf32> -> vector<256x2xf32>
    %c0_4 = arith.constant 0 : index
    %c0_5 = arith.constant 0 : index
    %4 = vector.load %arg6[%c0_4, %c0_5] : memref<1x2xf32, #tpu.memory_space<vmem>>, vector<1x2xf32>
    %5 = vector.broadcast %4 : vector<1x2xf32> to vector<256x2xf32>
    %6 = arith.addf %3, %5 : vector<256x2xf32>
    %c0_6 = arith.constant 0 : index
    %c0_7 = arith.constant 0 : index
    %7 = vector.load %arg4[%c0_6, %c0_7] : memref<2x16xf32, #tpu.memory_space<vmem>>, vector<2x16xf32>
    %cst_8 = arith.constant dense<0.000000e+00> : vector<256x2xf32>
    %8 = tpu.matmul %1, %7, %cst_8 {dimension_numbers = #tpu.dot_dimension_numbers<[1], [1], [0], [0], [0, 0, 1, 0], [], []>} : vector<256x16xf32>, vector<2x16xf32>, vector<256x2xf32> -> vector<256x2xf32>
    %c0_9 = arith.constant 0 : index
    %c0_10 = arith.constant 0 : index
    %9 = vector.load %arg7[%c0_9, %c0_10] : memref<1x2xf32, #tpu.memory_space<vmem>>, vector<1x2xf32>
    %10 = vector.broadcast %9 : vector<1x2xf32> to vector<256x2xf32>
    %11 = arith.addf %8, %10 : vector<256x2xf32>
    %c0_11 = arith.constant 0 : index
    %c0_12 = arith.constant 0 : index
    %12 = vector.load %arg5[%c0_11, %c0_12] : memref<16x16xf32, #tpu.memory_space<vmem>>, vector<16x16xf32>
    %cst_13 = arith.constant dense<0.000000e+00> : vector<256x16xf32>
    %13 = tpu.matmul %1, %12, %cst_13 {dimension_numbers = #tpu.dot_dimension_numbers<[1], [1], [0], [0], [0, 0, 1, 0], [], []>} : vector<256x16xf32>, vector<16x16xf32>, vector<256x16xf32> -> vector<256x16xf32>
    %c0_14 = arith.constant 0 : index
    %c0_15 = arith.constant 0 : index
    %14 = vector.load %arg8[%c0_14, %c0_15] : memref<1x16xf32, #tpu.memory_space<vmem>>, vector<1x16xf32>
    %15 = vector.broadcast %14 : vector<1x16xf32> to vector<256x16xf32>
    %16 = arith.addf %13, %15 : vector<256x16xf32>
    %cst_16 = arith.constant dense<0.000000e+00> : vector<256x256xf32>
    %17 = tpu.matmul %6, %11, %cst_16 {dimension_numbers = #tpu.dot_dimension_numbers<[1], [1], [0], [0], [0, 0, 1, 0], [], []>} : vector<256x2xf32>, vector<256x2xf32>, vector<256x256xf32> -> vector<256x256xf32>
    %cst_17 = arith.constant dense<0xFF800000> : vector<256xf32>
    %18 = vector.multi_reduction <maximumf>, %17, %cst_17 [1] : vector<256x256xf32> to vector<256xf32>
    %19 = vector.shape_cast %18 : vector<256xf32> to vector<256x1xf32>
    %20 = vector.broadcast %19 : vector<256x1xf32> to vector<256x256xf32>
    %21 = arith.subf %17, %20 : vector<256x256xf32>
    %22 = math.exp %21 : vector<256x256xf32>
    %cst_18 = arith.constant dense<0.000000e+00> : vector<256xf32>
    %23 = vector.multi_reduction <add>, %22, %cst_18 [1] : vector<256x256xf32> to vector<256xf32>
    %24 = vector.shape_cast %23 : vector<256xf32> to vector<256x1xf32>
    %25 = tpu.reciprocal %24 {approx = true} : vector<256x1xf32> -> vector<256x1xf32>
    %26 = vector.broadcast %25 : vector<256x1xf32> to vector<256x256xf32>
    %27 = arith.mulf %22, %26 : vector<256x256xf32>
    %cst_19 = arith.constant dense<0.000000e+00> : vector<256x16xf32>
    %28 = tpu.matmul %27, %16, %cst_19 {dimension_numbers = #tpu.dot_dimension_numbers<[1], [0], [0], [1], [0, 0, 1, 1], [], []>} : vector<256x256xf32>, vector<256x16xf32>, vector<256x16xf32> -> vector<256x16xf32>
    %c0_20 = arith.constant 0 : index
    %29 = memref.load %arg1[%c0_20] : memref<1xf32, #tpu.memory_space<smem>>
    %30 = vector.broadcast %29 : f32 to vector<256x16xf32>
    %31 = arith.mulf %30, %28 : vector<256x16xf32>
    %32 = arith.addf %31, %1 : vector<256x16xf32>
    %c0_21 = arith.constant 0 : index
    %c0_22 = arith.constant 0 : index
    %c0_23 = arith.constant 0 : index
    %33 = vector.load %arg9[%c0_21, %c0_22, %c0_23] : memref<1x256x16xf32, #tpu.memory_space<vmem>>, vector<1x256x16xf32>
    %34 = vector.shape_cast %33 : vector<1x256x16xf32> to vector<256x16xf32>
    %35 = vector.shape_cast %32 : vector<256x16xf32> to vector<1x256x16xf32>
    tpu.vector_store %arg9[%c0_21, %c0_22, %c0_23], %35 {strides = array<i32>} : memref<1x256x16xf32, #tpu.memory_space<vmem>>, vector<1x256x16xf32>,
    return
  }
  func.func @transform_0(%arg0: i32) -> i32 {
    %c0_i32 = arith.constant 0 : i32
    %c0_i32_0 = arith.constant 0 : i32
    return %c0_i32 : i32
  }
  func.func @transform_1(%arg0: i32) -> (i32, i32, i32) {
    %c0_i32 = arith.constant 0 : i32
    %c0_i32_0 = arith.constant 0 : i32
    %c0_i32_1 = arith.constant 0 : i32
    return %arg0, %c0_i32, %c0_i32_0 : i32, i32, i32
  }
  func.func @transform_2(%arg0: i32) -> (i32, i32) {
    %c0_i32 = arith.constant 0 : i32
    %c0_i32_0 = arith.constant 0 : i32
    %c0_i32_1 = arith.constant 0 : i32
    return %c0_i32, %c0_i32_0 : i32, i32
  }
  func.func @transform_3(%arg0: i32) -> (i32, i32) {
    %c0_i32 = arith.constant 0 : i32
    %c0_i32_0 = arith.constant 0 : i32
    %c0_i32_1 = arith.constant 0 : i32
    return %c0_i32, %c0_i32_0 : i32, i32
  }
  func.func @transform_4(%arg0: i32) -> (i32, i32) {
    %c0_i32 = arith.constant 0 : i32
    %c0_i32_0 = arith.constant 0 : i32
    %c0_i32_1 = arith.constant 0 : i32
    return %c0_i32, %c0_i32_0 : i32, i32
  }
  func.func @transform_5(%arg0: i32) -> (i32, i32) {
    %c0_i32 = arith.constant 0 : i32
    %c0_i32_0 = arith.constant 0 : i32
    %c0_i32_1 = arith.constant 0 : i32
    return %c0_i32, %c0_i32_0 : i32, i32
  }
  func.func @transform_6(%arg0: i32) -> (i32, i32) {
    %c0_i32 = arith.constant 0 : i32
    %c0_i32_0 = arith.constant 0 : i32
    %c0_i32_1 = arith.constant 0 : i32
    return %c0_i32, %c0_i32_0 : i32, i32
  }
  func.func @transform_7(%arg0: i32) -> (i32, i32) {
    %c0_i32 = arith.constant 0 : i32
    %c0_i32_0 = arith.constant 0 : i32
    %c0_i32_1 = arith.constant 0 : i32
    return %c0_i32, %c0_i32_0 : i32, i32
  }
  func.func @transform_8(%arg0: i32) -> (i32, i32, i32) {
    %c0_i32 = arith.constant 0 : i32
    %c0_i32_0 = arith.constant 0 : i32
    %c0_i32_1 = arith.constant 0 : i32
    return %arg0, %c0_i32, %c0_i32_0 : i32, i32, i32
  }
}

module attributes {stable_mosaic.version = 11 : i64} {
  func.func @_inorm_bias_relu_kernel(%arg0: i32, %arg1: memref<16x256xf32, #tpu.memory_space<vmem>>, %arg2: memref<16x1xf32, #tpu.memory_space<vmem>>, %arg3: memref<16x256xf32, #tpu.memory_space<vmem>>) attributes {dimension_semantics = [#tpu.dimension_semantics<parallel>], iteration_bounds = array<i64: 2>, scalar_prefetch = 0 : i64, scratch_operands = 0 : i64, tpu.core_type = #tpu.core_type<tc>, window_params = [{transform_indices = @transform_0, window_bounds = array<i64: 16, 256>}, {transform_indices = @transform_1, window_bounds = array<i64: 16, 1>}, {transform_indices = @transform_2, window_bounds = array<i64: 16, 256>}]} {
    %c0 = arith.constant 0 : index
    %c0_0 = arith.constant 0 : index
    %0 = vector.load %arg1[%c0, %c0_0] : memref<16x256xf32, #tpu.memory_space<vmem>>, vector<16x256xf32>
    %c0_1 = arith.constant 0 : index
    %c0_2 = arith.constant 0 : index
    %1 = vector.load %arg2[%c0_1, %c0_2] : memref<16x1xf32, #tpu.memory_space<vmem>>, vector<16x1xf32>
    %2 = vector.broadcast %1 : vector<16x1xf32> to vector<16x256xf32>
    %3 = arith.addf %0, %2 : vector<16x256xf32>
    %cst = arith.constant dense<0.000000e+00> : vector<16xf32>
    %4 = vector.multi_reduction <add>, %3, %cst [1] : vector<16x256xf32> to vector<16xf32>
    %5 = vector.shape_cast %4 : vector<16xf32> to vector<16x1xf32>
    %cst_3 = arith.constant 2.560000e+02 : f32
    %6 = vector.broadcast %cst_3 : f32 to vector<16x1xf32>
    %7 = arith.divf %5, %6 : vector<16x1xf32>
    %8 = vector.broadcast %7 : vector<16x1xf32> to vector<16x256xf32>
    %9 = arith.subf %3, %8 : vector<16x256xf32>
    %10 = arith.mulf %9, %9 : vector<16x256xf32>
    %cst_4 = arith.constant dense<0.000000e+00> : vector<16xf32>
    %11 = vector.multi_reduction <add>, %10, %cst_4 [1] : vector<16x256xf32> to vector<16xf32>
    %12 = vector.shape_cast %11 : vector<16xf32> to vector<16x1xf32>
    %cst_5 = arith.constant 2.560000e+02 : f32
    %13 = vector.broadcast %cst_5 : f32 to vector<16x1xf32>
    %14 = arith.divf %12, %13 : vector<16x1xf32>
    %15 = vector.broadcast %7 : vector<16x1xf32> to vector<16x256xf32>
    %16 = arith.subf %3, %15 : vector<16x256xf32>
    %cst_6 = arith.constant 9.99999974E-6 : f32
    %17 = vector.broadcast %cst_6 : f32 to vector<16x1xf32>
    %18 = arith.addf %14, %17 : vector<16x1xf32>
    %19 = math.rsqrt %18 : vector<16x1xf32>
    %20 = vector.broadcast %19 : vector<16x1xf32> to vector<16x256xf32>
    %21 = arith.mulf %16, %20 : vector<16x256xf32>
    %cst_7 = arith.constant 0.000000e+00 : f32
    %22 = vector.broadcast %cst_7 : f32 to vector<16x256xf32>
    %23 = arith.maximumf %21, %22 : vector<16x256xf32>
    %c0_8 = arith.constant 0 : index
    %c0_9 = arith.constant 0 : index
    %24 = vector.load %arg3[%c0_8, %c0_9] : memref<16x256xf32, #tpu.memory_space<vmem>>, vector<16x256xf32>
    tpu.vector_store %arg3[%c0_8, %c0_9], %23 {strides = array<i32>} : memref<16x256xf32, #tpu.memory_space<vmem>>, vector<16x256xf32>,
    return
  }
  func.func @transform_0(%arg0: i32) -> (i32, i32) {
    %c0_i32 = arith.constant 0 : i32
    %c0_i32_0 = arith.constant 0 : i32
    return %arg0, %c0_i32 : i32, i32
  }
  func.func @transform_1(%arg0: i32) -> (i32, i32) {
    %c0_i32 = arith.constant 0 : i32
    %c0_i32_0 = arith.constant 0 : i32
    return %arg0, %c0_i32 : i32, i32
  }
  func.func @transform_2(%arg0: i32) -> (i32, i32) {
    %c0_i32 = arith.constant 0 : i32
    %c0_i32_0 = arith.constant 0 : i32
    return %arg0, %c0_i32 : i32, i32
  }
}

</mosaic_0001>

<llo_original>
// kernel: tile.18
$region0: #{tile.18}
  #allocation0 [shape = 's32[1]{0}', space=sflag, size = 0x4, scoped, tag = 'scoped memory for tile.18']
  %s0 = inlined_call_operand.vmem [shape: f32[16], index: 0, kind: input, shape index: {}]
  %s1 = inlined_call_operand.vmem [shape: f32[2,16], index: 1, kind: output, shape index: {}]
  // Predicated region
  $region2: #{tile.18} parent=0 // pred_check
    _
  $region3: #{tile.18} parent=0 // pred_check_branch
    %3 = sbr.rel (0) target = $region5
  $region4: #{tile.18} parent=0 // pred_region
    _
  $region5: #{tile.18} parent=0 // pred_fallthru
    _
  %v4 = vld [vmem:[%s0] ss:$0 sm:$0xff]
  %5 = vst [vmem:[%s1] sm:$0x3] %v4

// kernel: tile.0
$region0: #{tile.0}
  %s0 = inlined_call_operand.vmem [shape: f32[2,16], index: 0, kind: input, shape index: {}]
  %s1 = inlined_call_operand.vmem [shape: f32[32,1], index: 1, kind: output, shape index: {}]
  $region1: #{tile.0} parent=0
    #allocation0 [shape = 'u8[4096]{0}', space=vmem, size = 0x1000, scoped, tag = 'scoped mem for input reshape']
    %s3 = ssub.s32 4, 1
    %v4 = vld [vmem:[%s0] sm:%s3]
    %5 = vst [vmem:[#allocation0] sm:%s3] %v4
    %v6 = vld [vmem:[#allocation0] sm:$0x3]
    %vm7 = vcmask 7168
    %8 = vst.msk [vmem:[%s1] ss:$16 sm:$0x3] %vm7, %v6
    %v9 = vld [vmem:[#allocation0] sm:$0x3]
    %10 = vrot.lane.b32.xlu0 %v9, 127
    %v11 = vpop.permute.xlu0 %10
    %vm12 = vcmask 7168
    %s13 = scalar_lea.vmem %s1, 1
    %14 = vst.msk [vmem:[%s13] ss:$16 sm:$0x3] %vm12, %v11
    %v15 = vld [vmem:[#allocation0] sm:$0x3]
    %16 = vrot.lane.b32.xlu0 %v15, 126
    %v17 = vpop.permute.xlu0 %16
    %vm18 = vcmask 7168
    %s19 = scalar_lea.vmem %s1, 2
    %20 = vst.msk [vmem:[%s19] ss:$16 sm:$0x3] %vm18, %v17
    %v21 = vld [vmem:[#allocation0] sm:$0x3]
    %22 = vrot.lane.b32.xlu0 %v21, 125
    %v23 = vpop.permute.xlu0 %22
    %vm24 = vcmask 7168
    %s25 = scalar_lea.vmem %s1, 3
    %26 = vst.msk [vmem:[%s25] ss:$16 sm:$0x3] %vm24, %v23
    %v27 = vld [vmem:[#allocation0] sm:$0x3]
    %28 = vrot.lane.b32.xlu0 %v27, 124
    %v29 = vpop.permute.xlu0 %28
    %vm30 = vcmask 7168
    %s31 = scalar_lea.vmem %s1, 4
    %32 = vst.msk [vmem:[%s31] ss:$16 sm:$0x3] %vm30, %v29
    %v33 = vld [vmem:[#allocation0] sm:$0x3]
    %34 = vrot.lane.b32.xlu0 %v33, 123
    %v35 = vpop.permute.xlu0 %34
    %vm36 = vcmask 7168
    %s37 = scalar_lea.vmem %s1, 5
    %38 = vst.msk [vmem:[%s37] ss:$16 sm:$0x3] %vm36, %v35
    %v39 = vld [vmem:[#allocation0] sm:$0x3]
    %40 = vrot.lane.b32.xlu0 %v39, 122
    %v41 = vpop.permute.xlu0 %40
    %vm42 = vcmask 7168
    %s43 = scalar_lea.vmem %s1, 6
    %44 = vst.msk [vmem:[%s43] ss:$16 sm:$0x3] %vm42, %v41
    %v45 = vld [vmem:[#allocation0] sm:$0x3]
    %46 = vrot.lane.b32.xlu0 %v45, 121
    %v47 = vpop.permute.xlu0 %46
    %vm48 = vcmask 7168
    %s49 = scalar_lea.vmem %s1, 7
    %50 = vst.msk [vmem:[%s49] ss:$16 sm:$0x3] %vm48, %v47
    %v51 = vld [vmem:[#allocation0] sm:$0x3]
    %52 = vrot.lane.b32.xlu0 %v51, 120
    %v53 = vpop.permute.xlu0 %52
    %vm54 = vcmask 7168
    %s55 = scalar_lea.vmem %s1, 8
    %56 = vst.msk [vmem:[%s55] ss:$16 sm:$0x3] %vm54, %v53
    %v57 = vld [vmem:[#allocation0] sm:$0x3]
    %58 = vrot.lane.b32.xlu0 %v57, 119
    %v59 = vpop.permute.xlu0 %58
    %vm60 = vcmask 7168
    %s61 = scalar_lea.vmem %s1, 9
    %62 = vst.msk [vmem:[%s61] ss:$16 sm:$0x3] %vm60, %v59
    %v63 = vld [vmem:[#allocation0] sm:$0x3]
    %64 = vrot.lane.b32.xlu0 %v63, 118
    %v65 = vpop.permute.xlu0 %64
    %vm66 = vcmask 7168
    %s67 = scalar_lea.vmem %s1, 10
    %68 = vst.msk [vmem:[%s67] ss:$16 sm:$0x3] %vm66, %v65
    %v69 = vld [vmem:[#allocation0] sm:$0x3]
    %70 = vrot.lane.b32.xlu0 %v69, 117
    %v71 = vpop.permute.xlu0 %70
    %vm72 = vcmask 7168
    %s73 = scalar_lea.vmem %s1, 11
    %74 = vst.msk [vmem:[%s73] ss:$16 sm:$0x3] %vm72, %v71
    %v75 = vld [vmem:[#allocation0] sm:$0x3]
    %76 = vrot.lane.b32.xlu0 %v75, 116
    %v77 = vpop.permute.xlu0 %76
    %vm78 = vcmask 7168
    %s79 = scalar_lea.vmem %s1, 12
    %80 = vst.msk [vmem:[%s79] ss:$16 sm:$0x3] %vm78, %v77
    %v81 = vld [vmem:[#allocation0] sm:$0x3]
    %82 = vrot.lane.b32.xlu0 %v81, 115
    %v83 = vpop.permute.xlu0 %82
    %vm84 = vcmask 7168
    %s85 = scalar_lea.vmem %s1, 13
    %86 = vst.msk [vmem:[%s85] ss:$16 sm:$0x3] %vm84, %v83
    %v87 = vld [vmem:[#allocation0] sm:$0x3]
    %88 = vrot.lane.b32.xlu0 %v87, 114
    %v89 = vpop.permute.xlu0 %88
    %vm90 = vcmask 7168
    %s91 = scalar_lea.vmem %s1, 14
    %92 = vst.msk [vmem:[%s91] ss:$16 sm:$0x3] %vm90, %v89
    %v93 = vld [vmem:[#allocation0] sm:$0x3]
    %94 = vrot.lane.b32.xlu0 %v93, 113
    %v95 = vpop.permute.xlu0 %94
    %vm96 = vcmask 7168
    %s97 = scalar_lea.vmem %s1, 15
    %98 = vst.msk [vmem:[%s97] ss:$16 sm:$0x3] %vm96, %v95

// kernel: up_forward.4
$region0: #{up_forward.4}
  #allocation0 [shape = 'u32[]', space=smem, size = 0x4, offset = 0x4, fixed_abs, tag = 'smem constant byte address 0x4 - core index']
  #allocation1 [shape = 'u32[72,128]{1,0:T(1,128)}', space=vmem, size = 0x9000, scoped, tag = 'internal scratch']
  %s0 = inlined_call_operand.vmem [shape: f32[32,256], index: 0, kind: input, shape index: {}]
  %s1 = inlined_call_operand.vmem [shape: f32[32,1], index: 1, kind: input, shape index: {}]
  %s2 = inlined_call_operand.vmem [shape: f32[32,256], index: 2, kind: output, shape index: {}]
  %s3 = sld [smem:[#allocation0]]
  $region41: #{up_forward.4} parent=0
    _
  %s5 = ssub.s32 1, %s3
  %s6 = scalar_select 0, %s5, %s3
  loop: start=0, step=1, limit=4
  $region2: #{up_forward.4} parent=0 // loop_pre_header
    _
  $region3: #{up_forward.4} parent=0 // loop_header
    %s8 = sphi 0, %s12
    %p9 = scmp.ge.s32.totalorder %s8, 4
    %s18 = sphi 0, %s20
    %s21 = sphi 0, %s18
    %s22 = sphi 0, %s21
    %s38 = sphi 0, %s22
    %s44 = sphi 0, %s46
    %s47 = sphi 0, %s44
    %s48 = sphi 0, %s47
    %s64 = sphi 0, %s48
    %s70 = sphi 0, %s72
    %s73 = sphi 0, %s70
    %s74 = sphi 0, %s73
    %s90 = sphi 0, %s74
  $region4: #{up_forward.4} parent=0 // loop_header_branch
    %11 = sbr.rel (%p9) target = $region8
  $region5: #{up_forward.4} parent=0 // loop_body
    %s13 = ssub.s32 %s8, 1
    %s14 = ssub.s32 %s8, 2
    %s15 = sadd.s32 %s8, 1
    %s16 = ssub.s32 %s8, %s15
    %p17 = scmp.eq.s32.totalorder %s16, 0
    %s19 = sadd.s32 %s18, 1
    %s20 = scalar_select %p17, %s18, %s19
    %p23 = pneg %p17
    %p24 = scmp.eq.s32.totalorder %s8, 1
    %p25 = por %p23, %p24
    %p26 = scmp.ne.s32.totalorder %s18, %s21
    %p27 = scmp.eq.s32.totalorder %s8, 0
    %p28 = por %p26, %p27
    %p29 = scmp.ne.s32.totalorder %s18, %s21
    %p30 = scmp.eq.s32.totalorder %s13, 1
    %p31 = por %p29, %p30
    %p32 = scmp.ne.s32.totalorder %s21, %s22
    %p33 = scmp.eq.s32.totalorder %s13, 0
    %p34 = por %p32, %p33
    %p35 = scmp.ne.s32.totalorder %s21, %s22
    %p36 = scmp.eq.s32.totalorder %s14, 1
    %p37 = por %p35, %p36
    %p39 = scmp.ne.s32.totalorder %s22, %s38
    %p40 = scmp.eq.s32.totalorder %s14, 0
    %p41 = por %p39, %p40
    %s42 = ssub.s32 %s8, %s15
    %p43 = scmp.eq.s32.totalorder %s42, 0
    %s45 = sadd.s32 %s44, 1
    %s46 = scalar_select %p43, %s44, %s45
    %p49 = pneg %p43
    %p50 = scmp.eq.s32.totalorder %s8, 1
    %p51 = por %p49, %p50
    %p52 = scmp.ne.s32.totalorder %s44, %s47
    %p53 = scmp.eq.s32.totalorder %s8, 0
    %p54 = por %p52, %p53
    %p55 = scmp.ne.s32.totalorder %s44, %s47
    %p56 = scmp.eq.s32.totalorder %s13, 1
    %p57 = por %p55, %p56
    %p58 = scmp.ne.s32.totalorder %s47, %s48
    %p59 = scmp.eq.s32.totalorder %s13, 0
    %p60 = por %p58, %p59
    %p61 = scmp.ne.s32.totalorder %s47, %s48
    %p62 = scmp.eq.s32.totalorder %s14, 1
    %p63 = por %p61, %p62
    %p65 = scmp.ne.s32.totalorder %s48, %s64
    %p66 = scmp.eq.s32.totalorder %s14, 0
    %p67 = por %p65, %p66
    %s68 = ssub.s32 %s8, %s15
    %p69 = scmp.eq.s32.totalorder %s68, 0
    %s71 = sadd.s32 %s70, 1
    %s72 = scalar_select %p69, %s70, %s71
    %p75 = pneg %p69
    %p76 = scmp.eq.s32.totalorder %s8, 1
    %p77 = por %p75, %p76
    %p78 = scmp.ne.s32.totalorder %s70, %s73
    %p79 = scmp.eq.s32.totalorder %s8, 0
    %p80 = por %p78, %p79
    %p81 = scmp.ne.s32.totalorder %s70, %s73
    %p82 = scmp.eq.s32.totalorder %s13, 1
    %p83 = por %p81, %p82
    %p84 = scmp.ne.s32.totalorder %s73, %s74
    %p85 = scmp.eq.s32.totalorder %s13, 0
    %p86 = por %p84, %p85
    %p87 = scmp.ne.s32.totalorder %s73, %s74
    %p88 = scmp.eq.s32.totalorder %s14, 1
    %p89 = por %p87, %p88
    %p91 = scmp.ne.s32.totalorder %s74, %s90
    %p92 = scmp.eq.s32.totalorder %s14, 0
    %p93 = por %p91, %p92
    %p94 = scmp.le.s32.totalorder 1, %s8
    %p95 = scmp.lt.s32.totalorder %s8, 3
    %p96 = pnand %p94, %p95
    %p97 = pneg %p96
    // Predicated region
    $region9: #{up_forward.4} parent=5 // pred_check
      _
    $region10: #{up_forward.4} parent=5 // pred_check_branch
      %99 = sbr.rel (%p96) target = $region12
    $region11: #{up_forward.4} parent=5 // pred_region
      %s100 = ssub.s32 %s8, 1
    $region12: #{up_forward.4} parent=5 // pred_fallthru
      _
    %p101 = scmp.lt.s32.totalorder %s8, 2
    // Predicated region
    $region13: #{up_forward.4} parent=5 // pred_check
      %p102 = pneg %p101
    $region14: #{up_forward.4} parent=5 // pred_check_branch
      %104 = sbr.rel (%p102) target = $region16
    $region15: #{up_forward.4} parent=5 // pred_region
      // Predicated region
      $region17: #{up_forward.4} parent=15 // pred_check
        %p105 = pneg %p28
      $region18: #{up_forward.4} parent=15 // pred_check_branch
        %107 = sbr.rel (%p105) target = $region20
      $region19: #{up_forward.4} parent=15 // pred_region
        %s108 = smul.u32 2, %s8
        %p109 = scmp.lt.s32.totalorder %s108, 3
        %s110 = scalar_select %p109, %s108, 3
        %s111 = smul.addr %s110, 2
        %s112 = smul.addr %s111, 8
        %s113 = scalar_lea.vmem %s0, %s112
        %s114 = smul.u32 2, %s8
      $region20: #{up_forward.4} parent=15 // pred_fallthru
        _
      // Predicated region
      $region21: #{up_forward.4} parent=15 // pred_check
        %p115 = pneg %p54
      $region22: #{up_forward.4} parent=15 // pred_check_branch
        %117 = sbr.rel (%p115) target = $region24
      $region23: #{up_forward.4} parent=15 // pred_region
        %s118 = smul.u32 2, %s8
        %p119 = scmp.lt.s32.totalorder %s118, 3
        %s120 = scalar_select %p119, %s118, 3
        %s121 = smul.addr %s120, 8
        %s122 = scalar_lea.vmem %s1, %s121
        %s123 = smul.u32 2, %s8
      $region24: #{up_forward.4} parent=15 // pred_fallthru
        _
    $region16: #{up_forward.4} parent=5 // pred_fallthru
      _
    %p124 = scmp.le.s32.totalorder 1, %s8
    %p125 = scmp.lt.s32.totalorder %s8, 3
    %p126 = pnand %p124, %p125
    %p127 = pneg %p126
    // Predicated region
    $region25: #{up_forward.4} parent=5 // pred_check
      _
    $region26: #{up_forward.4} parent=5 // pred_check_branch
      %129 = sbr.rel (%p126) target = $region28
    $region27: #{up_forward.4} parent=5 // pred_region
      %s130 = ssub.s32 %s8, 1
      %s131 = smul.u32 2, %s13
      %p132 = scmp.lt.s32.totalorder %s131, 3
      %s133 = scalar_select %p132, %s131, 3
      %s134 = smul.addr %s133, 2
      %s135 = smul.addr %s134, 8
      %s136 = scalar_lea.vmem %s0, %s135
      %p137 = pneg %p34
      %p138 = pneg %p31
      %s139 = smul.u32 2, %s13
      %p140 = scmp.lt.s32.totalorder %s139, 3
      %s141 = scalar_select %p140, %s139, 3
      %s142 = smul.addr %s141, 8
      %s143 = scalar_lea.vmem %s1, %s142
      %p144 = pneg %p60
      %p145 = pneg %p57
      %p146 = pneg %p86
      %p147 = pneg %p83
      %s148 = smul.u32 2, %s13
      %p149 = scmp.lt.s32.totalorder %s148, 3
      %s150 = scalar_select %p149, %s148, 3
      %s151 = smul.addr %s150, 2
      %s152 = smul.addr %s151, 8
      %s153 = scalar_lea.vmem %s2, %s152
      %s154 = smul.u32 2, %s13
      %p155 = scmp.lt.s32.totalorder %s154, 3
      %s156 = scalar_select %p155, %s154, 3
      %s157 = smul.addr %s156, 2
      %s158 = smul.addr %s157, 8
      %s159 = scalar_lea.vmem %s0, %s158
      %s160 = smul.u32 2, %s13
      %s161 = smul.u32 2, %s13
      %p162 = scmp.lt.s32.totalorder %s161, 3
      %s163 = scalar_select %p162, %s161, 3
      %s164 = smul.addr %s163, 8
      %s165 = scalar_lea.vmem %s1, %s164
      %s166 = smul.u32 2, %s13
      %s167 = smul.u32 2, %s13
      %p168 = scmp.lt.s32.totalorder %s167, 3
      %s169 = scalar_select %p168, %s167, 3
      %s170 = smul.addr %s169, 2
      %s171 = smul.addr %s170, 8
      %s172 = scalar_lea.vmem %s2, %s171
      %s173 = smul.u32 2, %s13
      %v174 = vld [vmem:[%s159] sm:$0xff]
      %v175 = vld [vmem:[%s159 + $0x8] sm:$0xff]
      %v176 = vld [vmem:[%s159 + $0x10] sm:$0xff]
      %v177 = vld [vmem:[%s159 + $0x18] sm:$0xff]
      %v178 = vld [vmem:[%s165] sm:$0xff]
      %v179 = vld [vmem:[%s165 + $0x8] sm:$0xff]
      %181 = vset.pattern.permute.xlu0 0
      %182 = vperm.xlu0 %181, %v178
      %v183 = vpop.permute.xlu0 %182
      %186 = vset.pattern.permute.xlu0 0
      %187 = vperm.xlu0 %186, %v179
      %v188 = vpop.permute.xlu0 %187
      %v190 = vadd.f32 %v174, %v183
      %v191 = vadd.f32 %v175, %v183
      %v192 = vadd.f32 %v176, %v188
      %v193 = vadd.f32 %v177, %v188
      %v194 = vadd.f32 %v190, %v191
      %195 = vadd.xlane.f32.xlu0 %v194
      %v196 = vpop.xlane.xlu0 %195
      %v197 = vadd.f32 %v192, %v193
      %198 = vadd.xlane.f32.xlu0 %v197
      %v199 = vpop.xlane.xlu0 %198
      %v200 = vrcp.pop 256.0
      %v201 = vmul.f32 256.0, %v200
      %v202 = vsub.f32 1.0, %v201
      %v203 = vmul.f32 %v200, %v202
      %v204 = vadd.f32 %v200, %v203
      %vm205 = vweird.f32 %v200
      %v206 = vsel %vm205, %v200, %v204
      %v207 = vmul.f32 %v196, %v206
      %v208 = vmul.f32 %v199, %v206
      %v209 = vsub.f32 %v190, %v207
      %v210 = vsub.f32 %v191, %v207
      %v211 = vsub.f32 %v192, %v208
      %v212 = vsub.f32 %v193, %v208
      %v213 = vmul.f32 %v209, %v209
      %v214 = vmul.f32 %v210, %v210
      %v215 = vmul.f32 %v211, %v211
      %v216 = vmul.f32 %v212, %v212
      %v217 = vadd.f32 %v213, %v214
      %218 = vadd.xlane.f32.xlu0 %v217
      %v219 = vpop.xlane.xlu0 %218
      %v220 = vadd.f32 %v215, %v216
      %221 = vadd.xlane.f32.xlu0 %v220
      %v222 = vpop.xlane.xlu0 %221
      %v223 = vmul.f32 %v219, %v206
      %v224 = vmul.f32 %v222, %v206
      %v225 = vadd.f32 %v223, 1e-05
      %v226 = vadd.f32 %v224, 1e-05
      %v227 = vrsqrt.pop %v225
      %v228 = vmul.f32 %v227, %v225
      %v229 = vmul.f32 %v228, %v227
      %v230 = vmul.f32 0.5, %v229
      %v231 = vsub.f32 1.5, %v230
      %v232 = vmul.f32 %v227, %v231
      %vm233 = vweird.f32 %v225
      %vm234 = vweird.f32 %v227
      %vm235 = vmor %vm233, %vm234
      %v236 = vsel %vm235, %v227, %v232
      %v237 = vrsqrt.pop %v226
      %v238 = vmul.f32 %v237, %v226
      %v239 = vmul.f32 %v238, %v237
      %v240 = vmul.f32 0.5, %v239
      %v241 = vsub.f32 1.5, %v240
      %v242 = vmul.f32 %v237, %v241
      %vm243 = vweird.f32 %v226
      %vm244 = vweird.f32 %v237
      %vm245 = vmor %vm243, %vm244
      %v246 = vsel %vm245, %v237, %v242
      %v247 = vmul.f32 %v209, %v236
      %v248 = vmul.f32 %v210, %v236
      %v249 = vmul.f32 %v211, %v246
      %v250 = vmul.f32 %v212, %v246
      %v251 = vmax.f32 %v247, 0.0
      %v252 = vmax.f32 %v248, 0.0
      %v253 = vmax.f32 %v249, 0.0
      %v254 = vmax.f32 %v250, 0.0
      %255 = vst [vmem:[%s172] sm:$0xff] %v251
      %256 = vst [vmem:[%s172 + $0x8] sm:$0xff] %v252
      %257 = vst [vmem:[%s172 + $0x10] sm:$0xff] %v253
      %258 = vst [vmem:[%s172 + $0x18] sm:$0xff] %v254
      %s259 = smul.u32 2, %s13
      %p260 = scmp.lt.s32.totalorder %s259, 3
      %s261 = scalar_select %p260, %s259, 3
      %s262 = smul.addr %s261, 2
      %s263 = smul.addr %s262, 8
      %s264 = scalar_lea.vmem %s2, %s263
      // Predicated region
      $region29: #{up_forward.4} parent=27 // pred_check
        %p265 = pneg %p83
      $region30: #{up_forward.4} parent=27 // pred_check_branch
        %267 = sbr.rel (%p265) target = $region32
      $region31: #{up_forward.4} parent=27 // pred_region
        %s268 = smul.u32 2, %s13
      $region32: #{up_forward.4} parent=27 // pred_fallthru
        _
    $region28: #{up_forward.4} parent=5 // pred_fallthru
      _
    %p269 = scmp.le.s32.totalorder 2, %s8
    // Predicated region
    $region33: #{up_forward.4} parent=5 // pred_check
      %p270 = pneg %p269
    $region34: #{up_forward.4} parent=5 // pred_check_branch
      %272 = sbr.rel (%p270) target = $region36
    $region35: #{up_forward.4} parent=5 // pred_region
      %s273 = ssub.s32 %s8, 2
      // Predicated region
      $region37: #{up_forward.4} parent=35 // pred_check
        %p274 = pneg %p89
      $region38: #{up_forward.4} parent=35 // pred_check_branch
        %276 = sbr.rel (%p274) target = $region40
      $region39: #{up_forward.4} parent=35 // pred_region
        %s277 = smul.u32 2, %s14
        %p278 = scmp.lt.s32.totalorder %s277, 3
        %s279 = scalar_select %p278, %s277, 3
        %s280 = smul.addr %s279, 2
        %s281 = smul.addr %s280, 8
        %s282 = scalar_lea.vmem %s2, %s281
      $region40: #{up_forward.4} parent=35 // pred_fallthru
        _
    $region36: #{up_forward.4} parent=5 // pred_fallthru
      _
  $region6: #{up_forward.4} parent=0 // loop_footer
    %s12 = sadd.s32 1, %s8
  $region7: #{up_forward.4} parent=0 // loop_footer_branch
    %7 = sbr.rel target = $region3
  $region8: #{up_forward.4} parent=0 // loop_exit
    _

// kernel: up_forward.5
$region0: #{up_forward.5}
  #allocation0 [shape = 'u32[]', space=smem, size = 0x4, offset = 0x4, fixed_abs, tag = 'smem constant byte address 0x4 - core index']
  #allocation1 [shape = 'u32[72,128]{1,0:T(1,128)}', space=vmem, size = 0x9000, scoped, tag = 'internal scratch']
  #allocation2 [shape = 'f32[1]{0:T(128)S(6)}', space=smem, size = 0x200, scoped, tag = 'scoped memory for up_forward.5']
  %s0 = inlined_call_operand.<no memory space> [shape: f32[1], index: 0, kind: input, shape index: {}]
  %s1 = inlined_call_operand.vmem [shape: f32[2,256,16], index: 1, kind: input, shape index: {}]
  %s2 = inlined_call_operand.vmem [shape: f32[2,16], index: 2, kind: input, shape index: {}]
  %s3 = inlined_call_operand.vmem [shape: f32[2,16], index: 3, kind: input, shape index: {}]
  %s4 = inlined_call_operand.vmem [shape: f32[16,16], index: 4, kind: input, shape index: {}]
  %s5 = inlined_call_operand.vmem [shape: f32[1,2], index: 5, kind: input, shape index: {}]
  %s6 = inlined_call_operand.vmem [shape: f32[1,2], index: 6, kind: input, shape index: {}]
  %s7 = inlined_call_operand.vmem [shape: f32[1,16], index: 7, kind: input, shape index: {}]
  %s8 = inlined_call_operand.vmem [shape: f32[2,256,16], index: 8, kind: output, shape index: {}]
  %s9 = sld [smem:[#allocation0]]
  $region65: #{up_forward.5} parent=0
    _
  %s11 = ssub.s32 1, %s9
  %s12 = scalar_select 0, %s11, %s9
  %13 = sst [smem:[#allocation2]] %s0
  loop: start=0, step=1, limit=4
  $region2: #{up_forward.5} parent=0 // loop_pre_header
    _
  $region3: #{up_forward.5} parent=0 // loop_header
    %s15 = sphi 0, %s19
    %p16 = scmp.ge.s32.totalorder %s15, 4
    %s23 = sphi 0, %s23
    %s25 = sphi 0, %s23
    %s26 = sphi 0, %s25
    %s40 = sphi 0, %s26
    %s46 = sphi 0, %s48
    %s49 = sphi 0, %s46
    %s50 = sphi 0, %s49
    %s66 = sphi 0, %s50
    %s70 = sphi 0, %s70
    %s72 = sphi 0, %s70
    %s73 = sphi 0, %s72
    %s87 = sphi 0, %s73
    %s91 = sphi 0, %s91
    %s93 = sphi 0, %s91
    %s94 = sphi 0, %s93
    %s108 = sphi 0, %s94
    %s112 = sphi 0, %s112
    %s114 = sphi 0, %s112
    %s115 = sphi 0, %s114
    %s129 = sphi 0, %s115
    %s133 = sphi 0, %s133
    %s135 = sphi 0, %s133
    %s136 = sphi 0, %s135
    %s150 = sphi 0, %s136
    %s154 = sphi 0, %s154
    %s156 = sphi 0, %s154
    %s157 = sphi 0, %s156
    %s171 = sphi 0, %s157
    %s175 = sphi 0, %s175
    %s177 = sphi 0, %s175
    %s178 = sphi 0, %s177
    %s192 = sphi 0, %s178
    %s198 = sphi 0, %s200
    %s201 = sphi 0, %s198
    %s202 = sphi 0, %s201
    %s218 = sphi 0, %s202
  $region4: #{up_forward.5} parent=0 // loop_header_branch
    %18 = sbr.rel (%p16) target = $region8
  $region5: #{up_forward.5} parent=0 // loop_body
    %s20 = ssub.s32 %s15, 1
    %s21 = ssub.s32 %s15, 2
    %s22 = sadd.s32 %s15, 1
    %s24 = sadd.s32 %s23, 1
    %p27 = scmp.eq.s32.totalorder %s15, 1
    %p28 = scmp.ne.s32.totalorder %s23, %s25
    %p29 = scmp.eq.s32.totalorder %s15, 0
    %p30 = por %p28, %p29
    %p31 = scmp.ne.s32.totalorder %s23, %s25
    %p32 = scmp.eq.s32.totalorder %s20, 1
    %p33 = por %p31, %p32
    %p34 = scmp.ne.s32.totalorder %s25, %s26
    %p35 = scmp.eq.s32.totalorder %s20, 0
    %p36 = por %p34, %p35
    %p37 = scmp.ne.s32.totalorder %s25, %s26
    %p38 = scmp.eq.s32.totalorder %s21, 1
    %p39 = por %p37, %p38
    %p41 = scmp.ne.s32.totalorder %s26, %s40
    %p42 = scmp.eq.s32.totalorder %s21, 0
    %p43 = por %p41, %p42
    %s44 = ssub.s32 %s15, %s22
    %p45 = scmp.eq.s32.totalorder %s44, 0
    %s47 = sadd.s32 %s46, 1
    %s48 = scalar_select %p45, %s46, %s47
    %p51 = pneg %p45
    %p52 = scmp.eq.s32.totalorder %s15, 1
    %p53 = por %p51, %p52
    %p54 = scmp.ne.s32.totalorder %s46, %s49
    %p55 = scmp.eq.s32.totalorder %s15, 0
    %p56 = por %p54, %p55
    %p57 = scmp.ne.s32.totalorder %s46, %s49
    %p58 = scmp.eq.s32.totalorder %s20, 1
    %p59 = por %p57, %p58
    %p60 = scmp.ne.s32.totalorder %s49, %s50
    %p61 = scmp.eq.s32.totalorder %s20, 0
    %p62 = por %p60, %p61
    %p63 = scmp.ne.s32.totalorder %s49, %s50
    %p64 = scmp.eq.s32.totalorder %s21, 1
    %p65 = por %p63, %p64
    %p67 = scmp.ne.s32.totalorder %s50, %s66
    %p68 = scmp.eq.s32.totalorder %s21, 0
    %p69 = por %p67, %p68
    %s71 = sadd.s32 %s70, 1
    %p74 = scmp.eq.s32.totalorder %s15, 1
    %p75 = scmp.ne.s32.totalorder %s70, %s72
    %p76 = scmp.eq.s32.totalorder %s15, 0
    %p77 = por %p75, %p76
    %p78 = scmp.ne.s32.totalorder %s70, %s72
    %p79 = scmp.eq.s32.totalorder %s20, 1
    %p80 = por %p78, %p79
    %p81 = scmp.ne.s32.totalorder %s72, %s73
    %p82 = scmp.eq.s32.totalorder %s20, 0
    %p83 = por %p81, %p82
    %p84 = scmp.ne.s32.totalorder %s72, %s73
    %p85 = scmp.eq.s32.totalorder %s21, 1
    %p86 = por %p84, %p85
    %p88 = scmp.ne.s32.totalorder %s73, %s87
    %p89 = scmp.eq.s32.totalorder %s21, 0
    %p90 = por %p88, %p89
    %s92 = sadd.s32 %s91, 1
    %p95 = scmp.eq.s32.totalorder %s15, 1
    %p96 = scmp.ne.s32.totalorder %s91, %s93
    %p97 = scmp.eq.s32.totalorder %s15, 0
    %p98 = por %p96, %p97
    %p99 = scmp.ne.s32.totalorder %s91, %s93
    %p100 = scmp.eq.s32.totalorder %s20, 1
    %p101 = por %p99, %p100
    %p102 = scmp.ne.s32.totalorder %s93, %s94
    %p103 = scmp.eq.s32.totalorder %s20, 0
    %p104 = por %p102, %p103
    %p105 = scmp.ne.s32.totalorder %s93, %s94
    %p106 = scmp.eq.s32.totalorder %s21, 1
    %p107 = por %p105, %p106
    %p109 = scmp.ne.s32.totalorder %s94, %s108
    %p110 = scmp.eq.s32.totalorder %s21, 0
    %p111 = por %p109, %p110
    %s113 = sadd.s32 %s112, 1
    %p116 = scmp.eq.s32.totalorder %s15, 1
    %p117 = scmp.ne.s32.totalorder %s112, %s114
    %p118 = scmp.eq.s32.totalorder %s15, 0
    %p119 = por %p117, %p118
    %p120 = scmp.ne.s32.totalorder %s112, %s114
    %p121 = scmp.eq.s32.totalorder %s20, 1
    %p122 = por %p120, %p121
    %p123 = scmp.ne.s32.totalorder %s114, %s115
    %p124 = scmp.eq.s32.totalorder %s20, 0
    %p125 = por %p123, %p124
    %p126 = scmp.ne.s32.totalorder %s114, %s115
    %p127 = scmp.eq.s32.totalorder %s21, 1
    %p128 = por %p126, %p127
    %p130 = scmp.ne.s32.totalorder %s115, %s129
    %p131 = scmp.eq.s32.totalorder %s21, 0
    %p132 = por %p130, %p131
    %s134 = sadd.s32 %s133, 1
    %p137 = scmp.eq.s32.totalorder %s15, 1
    %p138 = scmp.ne.s32.totalorder %s133, %s135
    %p139 = scmp.eq.s32.totalorder %s15, 0
    %p140 = por %p138, %p139
    %p141 = scmp.ne.s32.totalorder %s133, %s135
    %p142 = scmp.eq.s32.totalorder %s20, 1
    %p143 = por %p141, %p142
    %p144 = scmp.ne.s32.totalorder %s135, %s136
    %p145 = scmp.eq.s32.totalorder %s20, 0
    %p146 = por %p144, %p145
    %p147 = scmp.ne.s32.totalorder %s135, %s136
    %p148 = scmp.eq.s32.totalorder %s21, 1
    %p149 = por %p147, %p148
    %p151 = scmp.ne.s32.totalorder %s136, %s150
    %p152 = scmp.eq.s32.totalorder %s21, 0
    %p153 = por %p151, %p152
    %s155 = sadd.s32 %s154, 1
    %p158 = scmp.eq.s32.totalorder %s15, 1
    %p159 = scmp.ne.s32.totalorder %s154, %s156
    %p160 = scmp.eq.s32.totalorder %s15, 0
    %p161 = por %p159, %p160
    %p162 = scmp.ne.s32.totalorder %s154, %s156
    %p163 = scmp.eq.s32.totalorder %s20, 1
    %p164 = por %p162, %p163
    %p165 = scmp.ne.s32.totalorder %s156, %s157
    %p166 = scmp.eq.s32.totalorder %s20, 0
    %p167 = por %p165, %p166
    %p168 = scmp.ne.s32.totalorder %s156, %s157
    %p169 = scmp.eq.s32.totalorder %s21, 1
    %p170 = por %p168, %p169
    %p172 = scmp.ne.s32.totalorder %s157, %s171
    %p173 = scmp.eq.s32.totalorder %s21, 0
    %p174 = por %p172, %p173
    %s176 = sadd.s32 %s175, 1
    %p179 = scmp.eq.s32.totalorder %s15, 1
    %p180 = scmp.ne.s32.totalorder %s175, %s177
    %p181 = scmp.eq.s32.totalorder %s15, 0
    %p182 = por %p180, %p181
    %p183 = scmp.ne.s32.totalorder %s175, %s177
    %p184 = scmp.eq.s32.totalorder %s20, 1
    %p185 = por %p183, %p184
    %p186 = scmp.ne.s32.totalorder %s177, %s178
    %p187 = scmp.eq.s32.totalorder %s20, 0
    %p188 = por %p186, %p187
    %p189 = scmp.ne.s32.totalorder %s177, %s178
    %p190 = scmp.eq.s32.totalorder %s21, 1
    %p191 = por %p189, %p190
    %p193 = scmp.ne.s32.totalorder %s178, %s192
    %p194 = scmp.eq.s32.totalorder %s21, 0
    %p195 = por %p193, %p194
    %s196 = ssub.s32 %s15, %s22
    %p197 = scmp.eq.s32.totalorder %s196, 0
    %s199 = sadd.s32 %s198, 1
    %s200 = scalar_select %p197, %s198, %s199
    %p203 = pneg %p197
    %p204 = scmp.eq.s32.totalorder %s15, 1
    %p205 = por %p203, %p204
    %p206 = scmp.ne.s32.totalorder %s198, %s201
    %p207 = scmp.eq.s32.totalorder %s15, 0
    %p208 = por %p206, %p207
    %p209 = scmp.ne.s32.totalorder %s198, %s201
    %p210 = scmp.eq.s32.totalorder %s20, 1
    %p211 = por %p209, %p210
    %p212 = scmp.ne.s32.totalorder %s201, %s202
    %p213 = scmp.eq.s32.totalorder %s20, 0
    %p214 = por %p212, %p213
    %p215 = scmp.ne.s32.totalorder %s201, %s202
    %p216 = scmp.eq.s32.totalorder %s21, 1
    %p217 = por %p215, %p216
    %p219 = scmp.ne.s32.totalorder %s202, %s218
    %p220 = scmp.eq.s32.totalorder %s21, 0
    %p221 = por %p219, %p220
    %p222 = scmp.le.s32.totalorder 1, %s15
    %p223 = scmp.lt.s32.totalorder %s15, 3
    %p224 = pnand %p222, %p223
    %p225 = pneg %p224
    // Predicated region
    $region9: #{up_forward.5} parent=5 // pred_check
      _
    $region10: #{up_forward.5} parent=5 // pred_check_branch
      %227 = sbr.rel (%p224) target = $region12
    $region11: #{up_forward.5} parent=5 // pred_region
      %s228 = ssub.s32 %s15, 1
      // Predicated region
      $region13: #{up_forward.5} parent=11 // pred_check
        %p229 = pneg %p36
      $region14: #{up_forward.5} parent=11 // pred_check_branch
        %231 = sbr.rel (%p229) target = $region16
      $region15: #{up_forward.5} parent=11 // pred_region
        _
      $region16: #{up_forward.5} parent=11 // pred_fallthru
        _
      // Predicated region
      $region17: #{up_forward.5} parent=11 // pred_check
        %p232 = pneg %p83
      $region18: #{up_forward.5} parent=11 // pred_check_branch
        %234 = sbr.rel (%p232) target = $region20
      $region19: #{up_forward.5} parent=11 // pred_region
        _
      $region20: #{up_forward.5} parent=11 // pred_fallthru
        _
      // Predicated region
      $region21: #{up_forward.5} parent=11 // pred_check
        %p235 = pneg %p104
      $region22: #{up_forward.5} parent=11 // pred_check_branch
        %237 = sbr.rel (%p235) target = $region24
      $region23: #{up_forward.5} parent=11 // pred_region
        _
      $region24: #{up_forward.5} parent=11 // pred_fallthru
        _
      // Predicated region
      $region25: #{up_forward.5} parent=11 // pred_check
        %p238 = pneg %p125
      $region26: #{up_forward.5} parent=11 // pred_check_branch
        %240 = sbr.rel (%p238) target = $region28
      $region27: #{up_forward.5} parent=11 // pred_region
        _
      $region28: #{up_forward.5} parent=11 // pred_fallthru
        _
      // Predicated region
      $region29: #{up_forward.5} parent=11 // pred_check
        %p241 = pneg %p146
      $region30: #{up_forward.5} parent=11 // pred_check_branch
        %243 = sbr.rel (%p241) target = $region32
      $region31: #{up_forward.5} parent=11 // pred_region
        _
      $region32: #{up_forward.5} parent=11 // pred_fallthru
        _
      // Predicated region
      $region33: #{up_forward.5} parent=11 // pred_check
        %p244 = pneg %p167
      $region34: #{up_forward.5} parent=11 // pred_check_branch
        %246 = sbr.rel (%p244) target = $region36
      $region35: #{up_forward.5} parent=11 // pred_region
        _
      $region36: #{up_forward.5} parent=11 // pred_fallthru
        _
      // Predicated region
      $region37: #{up_forward.5} parent=11 // pred_check
        %p247 = pneg %p188
      $region38: #{up_forward.5} parent=11 // pred_check_branch
        %249 = sbr.rel (%p247) target = $region40
      $region39: #{up_forward.5} parent=11 // pred_region
        _
      $region40: #{up_forward.5} parent=11 // pred_fallthru
        _
    $region12: #{up_forward.5} parent=5 // pred_fallthru
      _
    %p250 = scmp.lt.s32.totalorder %s15, 2
    // Predicated region
    $region41: #{up_forward.5} parent=5 // pred_check
      %p251 = pneg %p250
    $region42: #{up_forward.5} parent=5 // pred_check_branch
      %253 = sbr.rel (%p251) target = $region44
    $region43: #{up_forward.5} parent=5 // pred_region
      // Predicated region
      $region45: #{up_forward.5} parent=43 // pred_check
        %p254 = pneg %p56
      $region46: #{up_forward.5} parent=43 // pred_check_branch
        %256 = sbr.rel (%p254) target = $region48
      $region47: #{up_forward.5} parent=43 // pred_region
        %p257 = scmp.lt.s32.totalorder %s15, 1
        %s258 = scalar_select %p257, %s15, 1
        %s259 = smul.addr %s258, 32
        %s260 = smul.addr %s259, 8
        %s261 = scalar_lea.vmem %s1, %s260
      $region48: #{up_forward.5} parent=43 // pred_fallthru
        _
    $region44: #{up_forward.5} parent=5 // pred_fallthru
      _
    %p262 = scmp.le.s32.totalorder 1, %s15
    %p263 = scmp.lt.s32.totalorder %s15, 3
    %p264 = pnand %p262, %p263
    %p265 = pneg %p264
    // Predicated region
    $region49: #{up_forward.5} parent=5 // pred_check
      _
    $region50: #{up_forward.5} parent=5 // pred_check_branch
      %267 = sbr.rel (%p264) target = $region52
    $region51: #{up_forward.5} parent=5 // pred_region
      %s268 = ssub.s32 %s15, 1
      %p269 = pneg %p36
      %p270 = pneg %p33
      %p271 = scmp.lt.s32.totalorder %s20, 1
      %s272 = scalar_select %p271, %s20, 1
      %s273 = smul.addr %s272, 32
      %s274 = smul.addr %s273, 8
      %s275 = scalar_lea.vmem %s1, %s274
      %p276 = pneg %p62
      %p277 = pneg %p59
      %p278 = pneg %p83
      %p279 = pneg %p80
      %p280 = pneg %p104
      %p281 = pneg %p101
      %p282 = pneg %p125
      %p283 = pneg %p122
      %p284 = pneg %p146
      %p285 = pneg %p143
      %p286 = pneg %p167
      %p287 = pneg %p164
      %p288 = pneg %p188
      %p289 = pneg %p185
      %p290 = pneg %p214
      %p291 = pneg %p211
      %p292 = scmp.lt.s32.totalorder %s20, 1
      %s293 = scalar_select %p292, %s20, 1
      %s294 = smul.addr %s293, 32
      %s295 = smul.addr %s294, 8
      %s296 = scalar_lea.vmem %s8, %s295
      %p297 = scmp.lt.s32.totalorder %s20, 1
      %s298 = scalar_select %p297, %s20, 1
      %s299 = smul.addr %s298, 32
      %s300 = smul.addr %s299, 8
      %s301 = scalar_lea.vmem %s1, %s300
      %p302 = scmp.lt.s32.totalorder %s20, 1
      %s303 = scalar_select %p302, %s20, 1
      %s304 = smul.addr %s303, 32
      %s305 = smul.addr %s304, 8
      %s306 = scalar_lea.vmem %s8, %s305
      %v307 = vld [vmem:[%s301] sm:$0xff]
      %v308 = vld [vmem:[%s301 + $0x8] sm:$0xff]
      %v309 = vld [vmem:[%s301 + $0x10] sm:$0xff]
      %v310 = vld [vmem:[%s301 + $0x18] sm:$0xff]
      %v311 = vld [vmem:[%s301 + $0x20] sm:$0xff]
      %v312 = vld [vmem:[%s301 + $0x28] sm:$0xff]
      %v313 = vld [vmem:[%s301 + $0x30] sm:$0xff]
      %v314 = vld [vmem:[%s301 + $0x38] sm:$0xff]
      %v315 = vld [vmem:[%s301 + $0x40] sm:$0xff]
      %v316 = vld [vmem:[%s301 + $0x48] sm:$0xff]
      %v317 = vld [vmem:[%s301 + $0x50] sm:$0xff]
      %v318 = vld [vmem:[%s301 + $0x58] sm:$0xff]
      %v319 = vld [vmem:[%s301 + $0x60] sm:$0xff]
      %v320 = vld [vmem:[%s301 + $0x68] sm:$0xff]
      %v321 = vld [vmem:[%s301 + $0x70] sm:$0xff]
      %v322 = vld [vmem:[%s301 + $0x78] sm:$0xff]
      %v323 = vld [vmem:[%s301 + $0x80] sm:$0xff]
      %v324 = vld [vmem:[%s301 + $0x88] sm:$0xff]
      %v325 = vld [vmem:[%s301 + $0x90] sm:$0xff]
      %v326 = vld [vmem:[%s301 + $0x98] sm:$0xff]
      %v327 = vld [vmem:[%s301 + $0xa0] sm:$0xff]
      %v328 = vld [vmem:[%s301 + $0xa8] sm:$0xff]
      %v329 = vld [vmem:[%s301 + $0xb0] sm:$0xff]
      %v330 = vld [vmem:[%s301 + $0xb8] sm:$0xff]
      %v331 = vld [vmem:[%s301 + $0xc0] sm:$0xff]
      %v332 = vld [vmem:[%s301 + $0xc8] sm:$0xff]
      %v333 = vld [vmem:[%s301 + $0xd0] sm:$0xff]
      %v334 = vld [vmem:[%s301 + $0xd8] sm:$0xff]
      %v335 = vld [vmem:[%s301 + $0xe0] sm:$0xff]
      %v336 = vld [vmem:[%s301 + $0xe8] sm:$0xff]
      %v337 = vld [vmem:[%s301 + $0xf0] sm:$0xff]
      %v338 = vld [vmem:[%s301 + $0xf8] sm:$0xff]
      %v339 = vld [vmem:[%s2] sm:$0x3]
      %v340 = vld [vmem:[%s5] sm:$0x1]
      %v342 = vperm.slane %v340, 0
      %vm344 = vcmask 130048
      %v346 = vsel %vm344, %v307, 0
      %v349 = vsel %vm344, %v308, 0
      %v352 = vsel %vm344, %v309, 0
      %v355 = vsel %vm344, %v310, 0
      %v358 = vsel %vm344, %v311, 0
      %v361 = vsel %vm344, %v312, 0
      %v364 = vsel %vm344, %v313, 0
      %v367 = vsel %vm344, %v314, 0
      %v370 = vsel %vm344, %v315, 0
      %v373 = vsel %vm344, %v316, 0
      %v376 = vsel %vm344, %v317, 0
      %v379 = vsel %vm344, %v318, 0
      %v382 = vsel %vm344, %v319, 0
      %v385 = vsel %vm344, %v320, 0
      %v388 = vsel %vm344, %v321, 0
      %v391 = vsel %vm344, %v322, 0
      %v394 = vsel %vm344, %v323, 0
      %v397 = vsel %vm344, %v324, 0
      %v400 = vsel %vm344, %v325, 0
      %v403 = vsel %vm344, %v326, 0
      %v406 = vsel %vm344, %v327, 0
      %v409 = vsel %vm344, %v328, 0
      %v412 = vsel %vm344, %v329, 0
      %v415 = vsel %vm344, %v330, 0
      %v418 = vsel %vm344, %v331, 0
      %v421 = vsel %vm344, %v332, 0
      %v424 = vsel %vm344, %v333, 0
      %v427 = vsel %vm344, %v334, 0
      %v430 = vsel %vm344, %v335, 0
      %v433 = vsel %vm344, %v336, 0
      %v436 = vsel %vm344, %v337, 0
      %v439 = vsel %vm344, %v338, 0
      %v442 = vsel %vm344, %v339, 0
      %444 = vmatpush.xpose.msra.mxu0 0.0
      %445 = vmatpush.xpose.msra.mxu0 0.0
      %446 = vmatpush.xpose.msra.mxu0 0.0
      %447 = vmatpush.xpose.msra.mxu0 0.0
      %448 = vmatpush.xpose.msra.mxu0 0.0
      %449 = vmatpush.xpose.msra.mxu0 0.0
      %450 = vmatpush.xpose.msra.mxu0 0.0
      %451 = vmatpush.xpose.msra.mxu0 0.0
      %452 = vmatpush.xpose.msra.mxu0 0.0
      %453 = vmatpush.xpose.msra.mxu0 0.0
      %454 = vmatpush.xpose.msra.mxu0 0.0
      %455 = vmatpush.xpose.msra.mxu0 0.0
      %456 = vmatpush.xpose.msra.mxu0 0.0
      %457 = vmatpush.xpose.msra.mxu0 0.0
      %458 = vmatpush.xpose.msra.mxu0 0.0
      %459 = vmatpush.xpose.msra.mxu0 %v442
      %460 = vmatmul.f32.gmra.mxu0 %v346
      %v461 = vpop.f32.mrf.mxu0
      %v462 = vadd.f32 %v342, %v461
      %463 = vmatmul.f32.gmra.mxu0 %v349
      %v464 = vpop.f32.mrf.mxu0
      %v465 = vadd.f32 %v342, %v464
      %466 = vmatmul.f32.gmra.mxu0 %v352
      %v467 = vpop.f32.mrf.mxu0
      %v468 = vadd.f32 %v342, %v467
      %469 = vmatmul.f32.gmra.mxu0 %v355
      %v470 = vpop.f32.mrf.mxu0
      %v471 = vadd.f32 %v342, %v470
      %472 = vmatmul.f32.gmra.mxu0 %v358
      %v473 = vpop.f32.mrf.mxu0
      %v474 = vadd.f32 %v342, %v473
      %475 = vmatmul.f32.gmra.mxu0 %v361
      %v476 = vpop.f32.mrf.mxu0
      %v477 = vadd.f32 %v342, %v476
      %478 = vmatmul.f32.gmra.mxu0 %v364
      %v479 = vpop.f32.mrf.mxu0
      %v480 = vadd.f32 %v342, %v479
      %481 = vmatmul.f32.gmra.mxu0 %v367
      %v482 = vpop.f32.mrf.mxu0
      %v483 = vadd.f32 %v342, %v482
      %484 = vmatmul.f32.gmra.mxu0 %v370
      %v485 = vpop.f32.mrf.mxu0
      %v486 = vadd.f32 %v342, %v485
      %487 = vmatmul.f32.gmra.mxu0 %v373
      %v488 = vpop.f32.mrf.mxu0
      %v489 = vadd.f32 %v342, %v488
      %490 = vmatmul.f32.gmra.mxu0 %v376
      %v491 = vpop.f32.mrf.mxu0
      %v492 = vadd.f32 %v342, %v491
      %493 = vmatmul.f32.gmra.mxu0 %v379
      %v494 = vpop.f32.mrf.mxu0
      %v495 = vadd.f32 %v342, %v494
      %496 = vmatmul.f32.gmra.mxu0 %v382
      %v497 = vpop.f32.mrf.mxu0
      %v498 = vadd.f32 %v342, %v497
      %499 = vmatmul.f32.gmra.mxu0 %v385
      %v500 = vpop.f32.mrf.mxu0
      %v501 = vadd.f32 %v342, %v500
      %502 = vmatmul.f32.gmra.mxu0 %v388
      %v503 = vpop.f32.mrf.mxu0
      %v504 = vadd.f32 %v342, %v503
      %505 = vmatmul.f32.gmra.mxu0 %v391
      %v506 = vpop.f32.mrf.mxu0
      %v507 = vadd.f32 %v342, %v506
      %508 = vmatmul.f32.gmra.mxu0 %v394
      %v509 = vpop.f32.mrf.mxu0
      %v510 = vadd.f32 %v342, %v509
      %511 = vmatmul.f32.gmra.mxu0 %v397
      %v512 = vpop.f32.mrf.mxu0
      %v513 = vadd.f32 %v342, %v512
      %514 = vmatmul.f32.gmra.mxu0 %v400
      %v515 = vpop.f32.mrf.mxu0
      %v516 = vadd.f32 %v342, %v515
      %517 = vmatmul.f32.gmra.mxu0 %v403
      %v518 = vpop.f32.mrf.mxu0
      %v519 = vadd.f32 %v342, %v518
      %520 = vmatmul.f32.gmra.mxu0 %v406
      %v521 = vpop.f32.mrf.mxu0
      %v522 = vadd.f32 %v342, %v521
      %523 = vmatmul.f32.gmra.mxu0 %v409
      %v524 = vpop.f32.mrf.mxu0
      %v525 = vadd.f32 %v342, %v524
      %526 = vmatmul.f32.gmra.mxu0 %v412
      %v527 = vpop.f32.mrf.mxu0
      %v528 = vadd.f32 %v342, %v527
      %529 = vmatmul.f32.gmra.mxu0 %v415
      %v530 = vpop.f32.mrf.mxu0
      %v531 = vadd.f32 %v342, %v530
      %532 = vmatmul.f32.gmra.mxu0 %v418
      %v533 = vpop.f32.mrf.mxu0
      %v534 = vadd.f32 %v342, %v533
      %535 = vmatmul.f32.gmra.mxu0 %v421
      %v536 = vpop.f32.mrf.mxu0
      %v537 = vadd.f32 %v342, %v536
      %538 = vmatmul.f32.gmra.mxu0 %v424
      %v539 = vpop.f32.mrf.mxu0
      %v540 = vadd.f32 %v342, %v539
      %541 = vmatmul.f32.gmra.mxu0 %v427
      %v542 = vpop.f32.mrf.mxu0
      %v543 = vadd.f32 %v342, %v542
      %544 = vmatmul.f32.gmra.mxu0 %v430
      %v545 = vpop.f32.mrf.mxu0
      %v546 = vadd.f32 %v342, %v545
      %547 = vmatmul.f32.gmra.mxu0 %v433
      %v548 = vpop.f32.mrf.mxu0
      %v549 = vadd.f32 %v342, %v548
      %550 = vmatmul.f32.gmra.mxu0 %v436
      %v551 = vpop.f32.mrf.mxu0
      %v552 = vadd.f32 %v342, %v551
      %553 = vmatmul.f32.gmra.mxu0 %v439
      %v554 = vpop.f32.mrf.mxu0
      %v555 = vadd.f32 %v342, %v554
      %556 = vdwg.mxu0
      %v557 = vld [vmem:[%s3] sm:$0x3]
      %v558 = vld [vmem:[%s6] sm:$0x1]
      %v560 = vperm.slane %v558, 0
      %v563 = vsel %vm344, %v557, 0
      %565 = vmatpush.xpose.msra.mxu0 0.0
      %566 = vmatpush.xpose.msra.mxu0 0.0
      %567 = vmatpush.xpose.msra.mxu0 0.0
      %568 = vmatpush.xpose.msra.mxu0 0.0
      %569 = vmatpush.xpose.msra.mxu0 0.0
      %570 = vmatpush.xpose.msra.mxu0 0.0
      %571 = vmatpush.xpose.msra.mxu0 0.0
      %572 = vmatpush.xpose.msra.mxu0 0.0
      %573 = vmatpush.xpose.msra.mxu0 0.0
      %574 = vmatpush.xpose.msra.mxu0 0.0
      %575 = vmatpush.xpose.msra.mxu0 0.0
      %576 = vmatpush.xpose.msra.mxu0 0.0
      %577 = vmatpush.xpose.msra.mxu0 0.0
      %578 = vmatpush.xpose.msra.mxu0 0.0
      %579 = vmatpush.xpose.msra.mxu0 0.0
      %580 = vmatpush.xpose.msra.mxu0 %v563
      %581 = vmatmul.f32.gmra.mxu0 %v346
      %v582 = vpop.f32.mrf.mxu0
      %v583 = vadd.f32 %v560, %v582
      %584 = vmatmul.f32.gmra.mxu0 %v349
      %v585 = vpop.f32.mrf.mxu0
      %v586 = vadd.f32 %v560, %v585
      %587 = vmatmul.f32.gmra.mxu0 %v352
      %v588 = vpop.f32.mrf.mxu0
      %v589 = vadd.f32 %v560, %v588
      %590 = vmatmul.f32.gmra.mxu0 %v355
      %v591 = vpop.f32.mrf.mxu0
      %v592 = vadd.f32 %v560, %v591
      %593 = vmatmul.f32.gmra.mxu0 %v358
      %v594 = vpop.f32.mrf.mxu0
      %v595 = vadd.f32 %v560, %v594
      %596 = vmatmul.f32.gmra.mxu0 %v361
      %v597 = vpop.f32.mrf.mxu0
      %v598 = vadd.f32 %v560, %v597
      %599 = vmatmul.f32.gmra.mxu0 %v364
      %v600 = vpop.f32.mrf.mxu0
      %v601 = vadd.f32 %v560, %v600
      %602 = vmatmul.f32.gmra.mxu0 %v367
      %v603 = vpop.f32.mrf.mxu0
      %v604 = vadd.f32 %v560, %v603
      %605 = vmatmul.f32.gmra.mxu0 %v370
      %v606 = vpop.f32.mrf.mxu0
      %v607 = vadd.f32 %v560, %v606
      %608 = vmatmul.f32.gmra.mxu0 %v373
      %v609 = vpop.f32.mrf.mxu0
      %v610 = vadd.f32 %v560, %v609
      %611 = vmatmul.f32.gmra.mxu0 %v376
      %v612 = vpop.f32.mrf.mxu0
      %v613 = vadd.f32 %v560, %v612
      %614 = vmatmul.f32.gmra.mxu0 %v379
      %v615 = vpop.f32.mrf.mxu0
      %v616 = vadd.f32 %v560, %v615
      %617 = vmatmul.f32.gmra.mxu0 %v382
      %v618 = vpop.f32.mrf.mxu0
      %v619 = vadd.f32 %v560, %v618
      %620 = vmatmul.f32.gmra.mxu0 %v385
      %v621 = vpop.f32.mrf.mxu0
      %v622 = vadd.f32 %v560, %v621
      %623 = vmatmul.f32.gmra.mxu0 %v388
      %v624 = vpop.f32.mrf.mxu0
      %v625 = vadd.f32 %v560, %v624
      %626 = vmatmul.f32.gmra.mxu0 %v391
      %v627 = vpop.f32.mrf.mxu0
      %v628 = vadd.f32 %v560, %v627
      %629 = vmatmul.f32.gmra.mxu0 %v394
      %v630 = vpop.f32.mrf.mxu0
      %v631 = vadd.f32 %v560, %v630
      %632 = vmatmul.f32.gmra.mxu0 %v397
      %v633 = vpop.f32.mrf.mxu0
      %v634 = vadd.f32 %v560, %v633
      %635 = vmatmul.f32.gmra.mxu0 %v400
      %v636 = vpop.f32.mrf.mxu0
      %v637 = vadd.f32 %v560, %v636
      %638 = vmatmul.f32.gmra.mxu0 %v403
      %v639 = vpop.f32.mrf.mxu0
      %v640 = vadd.f32 %v560, %v639
      %641 = vmatmul.f32.gmra.mxu0 %v406
      %v642 = vpop.f32.mrf.mxu0
      %v643 = vadd.f32 %v560, %v642
      %644 = vmatmul.f32.gmra.mxu0 %v409
      %v645 = vpop.f32.mrf.mxu0
      %v646 = vadd.f32 %v560, %v645
      %647 = vmatmul.f32.gmra.mxu0 %v412
      %v648 = vpop.f32.mrf.mxu0
      %v649 = vadd.f32 %v560, %v648
      %650 = vmatmul.f32.gmra.mxu0 %v415
      %v651 = vpop.f32.mrf.mxu0
      %v652 = vadd.f32 %v560, %v651
      %653 = vmatmul.f32.gmra.mxu0 %v418
      %v654 = vpop.f32.mrf.mxu0
      %v655 = vadd.f32 %v560, %v654
      %656 = vmatmul.f32.gmra.mxu0 %v421
      %v657 = vpop.f32.mrf.mxu0
      %v658 = vadd.f32 %v560, %v657
      %659 = vmatmul.f32.gmra.mxu0 %v424
      %v660 = vpop.f32.mrf.mxu0
      %v661 = vadd.f32 %v560, %v660
      %662 = vmatmul.f32.gmra.mxu0 %v427
      %v663 = vpop.f32.mrf.mxu0
      %v664 = vadd.f32 %v560, %v663
      %665 = vmatmul.f32.gmra.mxu0 %v430
      %v666 = vpop.f32.mrf.mxu0
      %v667 = vadd.f32 %v560, %v666
      %668 = vmatmul.f32.gmra.mxu0 %v433
      %v669 = vpop.f32.mrf.mxu0
      %v670 = vadd.f32 %v560, %v669
      %671 = vmatmul.f32.gmra.mxu0 %v436
      %v672 = vpop.f32.mrf.mxu0
      %v673 = vadd.f32 %v560, %v672
      %674 = vmatmul.f32.gmra.mxu0 %v439
      %v675 = vpop.f32.mrf.mxu0
      %v676 = vadd.f32 %v560, %v675
      %677 = vdwg.mxu0
      %v678 = vld [vmem:[%s4] sm:$0xff]
      %v679 = vld [vmem:[%s4 + $0x8] sm:$0xff]
      %v680 = vld [vmem:[%s7] sm:$0x1]
      %v682 = vperm.slane %v680, 0
      %v685 = vsel %vm344, %v678, 0
      %v688 = vsel %vm344, %v679, 0
      %690 = vmatpush.xpose.msra.mxu0 0.0
      %691 = vmatpush.xpose.msra.mxu0 0.0
      %692 = vmatpush.xpose.msra.mxu0 0.0
      %693 = vmatpush.xpose.msra.mxu0 0.0
      %694 = vmatpush.xpose.msra.mxu0 0.0
      %695 = vmatpush.xpose.msra.mxu0 0.0
      %696 = vmatpush.xpose.msra.mxu0 0.0
      %697 = vmatpush.xpose.msra.mxu0 0.0
      %698 = vmatpush.xpose.msra.mxu0 0.0
      %699 = vmatpush.xpose.msra.mxu0 0.0
      %700 = vmatpush.xpose.msra.mxu0 0.0
      %701 = vmatpush.xpose.msra.mxu0 0.0
      %702 = vmatpush.xpose.msra.mxu0 0.0
      %703 = vmatpush.xpose.msra.mxu0 0.0
      %704 = vmatpush.xpose.msra.mxu0 %v688
      %705 = vmatpush.xpose.msra.mxu0 %v685
      %706 = vmatmul.f32.gmra.mxu0 %v346
      %v707 = vpop.f32.mrf.mxu0
      %v708 = vadd.f32 %v682, %v707
      %709 = vmatmul.f32.gmra.mxu0 %v349
      %v710 = vpop.f32.mrf.mxu0
      %v711 = vadd.f32 %v682, %v710
      %712 = vmatmul.f32.gmra.mxu0 %v352
      %v713 = vpop.f32.mrf.mxu0
      %v714 = vadd.f32 %v682, %v713
      %715 = vmatmul.f32.gmra.mxu0 %v355
      %v716 = vpop.f32.mrf.mxu0
      %v717 = vadd.f32 %v682, %v716
      %718 = vmatmul.f32.gmra.mxu0 %v358
      %v719 = vpop.f32.mrf.mxu0
      %v720 = vadd.f32 %v682, %v719
      %721 = vmatmul.f32.gmra.mxu0 %v361
      %v722 = vpop.f32.mrf.mxu0
      %v723 = vadd.f32 %v682, %v722
      %724 = vmatmul.f32.gmra.mxu0 %v364
      %v725 = vpop.f32.mrf.mxu0
      %v726 = vadd.f32 %v682, %v725
      %727 = vmatmul.f32.gmra.mxu0 %v367
      %v728 = vpop.f32.mrf.mxu0
      %v729 = vadd.f32 %v682, %v728
      %730 = vmatmul.f32.gmra.mxu0 %v370
      %v731 = vpop.f32.mrf.mxu0
      %v732 = vadd.f32 %v682, %v731
      %733 = vmatmul.f32.gmra.mxu0 %v373
      %v734 = vpop.f32.mrf.mxu0
      %v735 = vadd.f32 %v682, %v734
      %736 = vmatmul.f32.gmra.mxu0 %v376
      %v737 = vpop.f32.mrf.mxu0
      %v738 = vadd.f32 %v682, %v737
      %739 = vmatmul.f32.gmra.mxu0 %v379
      %v740 = vpop.f32.mrf.mxu0
      %v741 = vadd.f32 %v682, %v740
      %742 = vmatmul.f32.gmra.mxu0 %v382
      %v743 = vpop.f32.mrf.mxu0
      %v744 = vadd.f32 %v682, %v743
      %745 = vmatmul.f32.gmra.mxu0 %v385
      %v746 = vpop.f32.mrf.mxu0
      %v747 = vadd.f32 %v682, %v746
      %748 = vmatmul.f32.gmra.mxu0 %v388
      %v749 = vpop.f32.mrf.mxu0
      %v750 = vadd.f32 %v682, %v749
      %751 = vmatmul.f32.gmra.mxu0 %v391
      %v752 = vpop.f32.mrf.mxu0
      %v753 = vadd.f32 %v682, %v752
      %754 = vmatmul.f32.gmra.mxu0 %v394
      %v755 = vpop.f32.mrf.mxu0
      %v756 = vadd.f32 %v682, %v755
      %757 = vmatmul.f32.gmra.mxu0 %v397
      %v758 = vpop.f32.mrf.mxu0
      %v759 = vadd.f32 %v682, %v758
      %760 = vmatmul.f32.gmra.mxu0 %v400
      %v761 = vpop.f32.mrf.mxu0
      %v762 = vadd.f32 %v682, %v761
      %763 = vmatmul.f32.gmra.mxu0 %v403
      %v764 = vpop.f32.mrf.mxu0
      %v765 = vadd.f32 %v682, %v764
      %766 = vmatmul.f32.gmra.mxu0 %v406
      %v767 = vpop.f32.mrf.mxu0
      %v768 = vadd.f32 %v682, %v767
      %769 = vmatmul.f32.gmra.mxu0 %v409
      %v770 = vpop.f32.mrf.mxu0
      %v771 = vadd.f32 %v682, %v770
      %772 = vmatmul.f32.gmra.mxu0 %v412
      %v773 = vpop.f32.mrf.mxu0
      %v774 = vadd.f32 %v682, %v773
      %775 = vmatmul.f32.gmra.mxu0 %v415
      %v776 = vpop.f32.mrf.mxu0
      %v777 = vadd.f32 %v682, %v776
      %778 = vmatmul.f32.gmra.mxu0 %v418
      %v779 = vpop.f32.mrf.mxu0
      %v780 = vadd.f32 %v682, %v779
      %781 = vmatmul.f32.gmra.mxu0 %v421
      %v782 = vpop.f32.mrf.mxu0
      %v783 = vadd.f32 %v682, %v782
      %784 = vmatmul.f32.gmra.mxu0 %v424
      %v785 = vpop.f32.mrf.mxu0
      %v786 = vadd.f32 %v682, %v785
      %787 = vmatmul.f32.gmra.mxu0 %v427
      %v788 = vpop.f32.mrf.mxu0
      %v789 = vadd.f32 %v682, %v788
      %790 = vmatmul.f32.gmra.mxu0 %v430
      %v791 = vpop.f32.mrf.mxu0
      %v792 = vadd.f32 %v682, %v791
      %793 = vmatmul.f32.gmra.mxu0 %v433
      %v794 = vpop.f32.mrf.mxu0
      %v795 = vadd.f32 %v682, %v794
      %796 = vmatmul.f32.gmra.mxu0 %v436
      %v797 = vpop.f32.mrf.mxu0
      %v798 = vadd.f32 %v682, %v797
      %799 = vmatmul.f32.gmra.mxu0 %v439
      %v800 = vpop.f32.mrf.mxu0
      %v801 = vadd.f32 %v682, %v800
      %802 = vdwg.mxu0
      %vm803 = vcmask 15360
      %v805 = vsel %vm803, %v462, 0
      %v808 = vsel %vm803, %v465, 0
      %v811 = vsel %vm803, %v468, 0
      %v814 = vsel %vm803, %v471, 0
      %v817 = vsel %vm803, %v474, 0
      %v820 = vsel %vm803, %v477, 0
      %v823 = vsel %vm803, %v480, 0
      %v826 = vsel %vm803, %v483, 0
      %v829 = vsel %vm803, %v486, 0
      %v832 = vsel %vm803, %v489, 0
      %v835 = vsel %vm803, %v492, 0
      %v838 = vsel %vm803, %v495, 0
      %v841 = vsel %vm803, %v498, 0
      %v844 = vsel %vm803, %v501, 0
      %v847 = vsel %vm803, %v504, 0
      %v850 = vsel %vm803, %v507, 0
      %v853 = vsel %vm803, %v510, 0
      %v856 = vsel %vm803, %v513, 0
      %v859 = vsel %vm803, %v516, 0
      %v862 = vsel %vm803, %v519, 0
      %v865 = vsel %vm803, %v522, 0
      %v868 = vsel %vm803, %v525, 0
      %v871 = vsel %vm803, %v528, 0
      %v874 = vsel %vm803, %v531, 0
      %v877 = vsel %vm803, %v534, 0
      %v880 = vsel %vm803, %v537, 0
      %v883 = vsel %vm803, %v540, 0
      %v886 = vsel %vm803, %v543, 0
      %v889 = vsel %vm803, %v546, 0
      %v892 = vsel %vm803, %v549, 0
      %v895 = vsel %vm803, %v552, 0
      %v898 = vsel %vm803, %v555, 0
      %v901 = vsel %vm803, %v583, 0
      %v904 = vsel %vm803, %v586, 0
      %v907 = vsel %vm803, %v589, 0
      %v910 = vsel %vm803, %v592, 0
      %v913 = vsel %vm803, %v595, 0
      %v916 = vsel %vm803, %v598, 0
      %v919 = vsel %vm803, %v601, 0
      %v922 = vsel %vm803, %v604, 0
      %v925 = vsel %vm803, %v607, 0
      %v928 = vsel %vm803, %v610, 0
      %v931 = vsel %vm803, %v613, 0
      %v934 = vsel %vm803, %v616, 0
      %v937 = vsel %vm803, %v619, 0
      %v940 = vsel %vm803, %v622, 0
      %v943 = vsel %vm803, %v625, 0
      %v946 = vsel %vm803, %v628, 0
      %v949 = vsel %vm803, %v631, 0
      %v952 = vsel %vm803, %v634, 0
      %v955 = vsel %vm803, %v637, 0
      %v958 = vsel %vm803, %v640, 0
      %v961 = vsel %vm803, %v643, 0
      %v964 = vsel %vm803, %v646, 0
      %v967 = vsel %vm803, %v649, 0
      %v970 = vsel %vm803, %v652, 0
      %v973 = vsel %vm803, %v655, 0
      %v976 = vsel %vm803, %v658, 0
      %v979 = vsel %vm803, %v661, 0
      %v982 = vsel %vm803, %v664, 0
      %v985 = vsel %vm803, %v667, 0
      %v988 = vsel %vm803, %v670, 0
      %v991 = vsel %vm803, %v673, 0
      %v994 = vsel %vm803, %v676, 0
      %996 = vmatpush.xpose.msra.mxu0 %v946
      %997 = vmatpush.xpose.msra.mxu0 %v943
      %998 = vmatpush.xpose.msra.mxu0 %v940
      %999 = vmatpush.xpose.msra.mxu0 %v937
      %1000 = vmatpush.xpose.msra.mxu0 %v934
      %1001 = vmatpush.xpose.msra.mxu0 %v931
      %1002 = vmatpush.xpose.msra.mxu0 %v928
      %1003 = vmatpush.xpose.msra.mxu0 %v925
      %1004 = vmatpush.xpose.msra.mxu0 %v922
      %1005 = vmatpush.xpose.msra.mxu0 %v919
      %1006 = vmatpush.xpose.msra.mxu0 %v916
      %1007 = vmatpush.xpose.msra.mxu0 %v913
      %1008 = vmatpush.xpose.msra.mxu0 %v910
      %1009 = vmatpush.xpose.msra.mxu0 %v907
      %1010 = vmatpush.xpose.msra.mxu0 %v904
      %1011 = vmatpush.xpose.msra.mxu0 %v901
      %1012 = vmatmul.f32.gmra.mxu0 %v805
      %v1013 = vpop.f32.mrf.mxu0
      %v1014 = vadd.f32 0.0, %v1013
      %1015 = vmatmul.f32.gmra.mxu0 %v808
      %v1016 = vpop.f32.mrf.mxu0
      %v1017 = vadd.f32 0.0, %v1016
      %1018 = vmatmul.f32.gmra.mxu0 %v811
      %v1019 = vpop.f32.mrf.mxu0
      %v1020 = vadd.f32 0.0, %v1019
      %1021 = vmatmul.f32.gmra.mxu0 %v814
      %v1022 = vpop.f32.mrf.mxu0
      %v1023 = vadd.f32 0.0, %v1022
      %1024 = vmatmul.f32.gmra.mxu0 %v817
      %v1025 = vpop.f32.mrf.mxu0
      %v1026 = vadd.f32 0.0, %v1025
      %1027 = vmatmul.f32.gmra.mxu0 %v820
      %v1028 = vpop.f32.mrf.mxu0
      %v1029 = vadd.f32 0.0, %v1028
      %1030 = vmatmul.f32.gmra.mxu0 %v823
      %v1031 = vpop.f32.mrf.mxu0
      %v1032 = vadd.f32 0.0, %v1031
      %1033 = vmatmul.f32.gmra.mxu0 %v826
      %v1034 = vpop.f32.mrf.mxu0
      %v1035 = vadd.f32 0.0, %v1034
      %1036 = vmatmul.f32.gmra.mxu0 %v829
      %v1037 = vpop.f32.mrf.mxu0
      %v1038 = vadd.f32 0.0, %v1037
      %1039 = vmatmul.f32.gmra.mxu0 %v832
      %v1040 = vpop.f32.mrf.mxu0
      %v1041 = vadd.f32 0.0, %v1040
      %1042 = vmatmul.f32.gmra.mxu0 %v835
      %v1043 = vpop.f32.mrf.mxu0
      %v1044 = vadd.f32 0.0, %v1043
      %1045 = vmatmul.f32.gmra.mxu0 %v838
      %v1046 = vpop.f32.mrf.mxu0
      %v1047 = vadd.f32 0.0, %v1046
      %1048 = vmatmul.f32.gmra.mxu0 %v841
      %v1049 = vpop.f32.mrf.mxu0
      %v1050 = vadd.f32 0.0, %v1049
      %1051 = vmatmul.f32.gmra.mxu0 %v844
      %v1052 = vpop.f32.mrf.mxu0
      %v1053 = vadd.f32 0.0, %v1052
      %1054 = vmatmul.f32.gmra.mxu0 %v847
      %v1055 = vpop.f32.mrf.mxu0
      %v1056 = vadd.f32 0.0, %v1055
      %1057 = vmatmul.f32.gmra.mxu0 %v850
      %v1058 = vpop.f32.mrf.mxu0
      %v1059 = vadd.f32 0.0, %v1058
      %1060 = vmatmul.f32.gmra.mxu0 %v853
      %v1061 = vpop.f32.mrf.mxu0
      %v1062 = vadd.f32 0.0, %v1061
      %1063 = vmatmul.f32.gmra.mxu0 %v856
      %v1064 = vpop.f32.mrf.mxu0
      %v1065 = vadd.f32 0.0, %v1064
      %1066 = vmatmul.f32.gmra.mxu0 %v859
      %v1067 = vpop.f32.mrf.mxu0
      %v1068 = vadd.f32 0.0, %v1067
      %1069 = vmatmul.f32.gmra.mxu0 %v862
      %v1070 = vpop.f32.mrf.mxu0
      %v1071 = vadd.f32 0.0, %v1070
      %1072 = vmatmul.f32.gmra.mxu0 %v865
      %v1073 = vpop.f32.mrf.mxu0
      %v1074 = vadd.f32 0.0, %v1073
      %1075 = vmatmul.f32.gmra.mxu0 %v868
      %v1076 = vpop.f32.mrf.mxu0
      %v1077 = vadd.f32 0.0, %v1076
      %1078 = vmatmul.f32.gmra.mxu0 %v871
      %v1079 = vpop.f32.mrf.mxu0
      %v1080 = vadd.f32 0.0, %v1079
      %1081 = vmatmul.f32.gmra.mxu0 %v874
      %v1082 = vpop.f32.mrf.mxu0
      %v1083 = vadd.f32 0.0, %v1082
      %1084 = vmatmul.f32.gmra.mxu0 %v877
      %v1085 = vpop.f32.mrf.mxu0
      %v1086 = vadd.f32 0.0, %v1085
      %1087 = vmatmul.f32.gmra.mxu0 %v880
      %v1088 = vpop.f32.mrf.mxu0
      %v1089 = vadd.f32 0.0, %v1088
      %1090 = vmatmul.f32.gmra.mxu0 %v883
      %v1091 = vpop.f32.mrf.mxu0
      %v1092 = vadd.f32 0.0, %v1091
      %1093 = vmatmul.f32.gmra.mxu0 %v886
      %v1094 = vpop.f32.mrf.mxu0
      %v1095 = vadd.f32 0.0, %v1094
      %1096 = vmatmul.f32.gmra.mxu0 %v889
      %v1097 = vpop.f32.mrf.mxu0
      %v1098 = vadd.f32 0.0, %v1097
      %1099 = vmatmul.f32.gmra.mxu0 %v892
      %v1100 = vpop.f32.mrf.mxu0
      %v1101 = vadd.f32 0.0, %v1100
      %1102 = vmatmul.f32.gmra.mxu0 %v895
      %v1103 = vpop.f32.mrf.mxu0
      %v1104 = vadd.f32 0.0, %v1103
      %1105 = vmatmul.f32.gmra.mxu0 %v898
      %v1106 = vpop.f32.mrf.mxu0
      %v1107 = vadd.f32 0.0, %v1106
      %1108 = vdwg.mxu0
      %1109 = vmatpush.xpose.msra.mxu0 %v994
      %1110 = vmatpush.xpose.msra.mxu0 %v991
      %1111 = vmatpush.xpose.msra.mxu0 %v988
      %1112 = vmatpush.xpose.msra.mxu0 %v985
      %1113 = vmatpush.xpose.msra.mxu0 %v982
      %1114 = vmatpush.xpose.msra.mxu0 %v979
      %1115 = vmatpush.xpose.msra.mxu0 %v976
      %1116 = vmatpush.xpose.msra.mxu0 %v973
      %1117 = vmatpush.xpose.msra.mxu0 %v970
      %1118 = vmatpush.xpose.msra.mxu0 %v967
      %1119 = vmatpush.xpose.msra.mxu0 %v964
      %1120 = vmatpush.xpose.msra.mxu0 %v961
      %1121 = vmatpush.xpose.msra.mxu0 %v958
      %1122 = vmatpush.xpose.msra.mxu0 %v955
      %1123 = vmatpush.xpose.msra.mxu0 %v952
      %1124 = vmatpush.xpose.msra.mxu0 %v949
      %1125 = vmatmul.f32.gmra.mxu0 %v805
      %v1126 = vpop.f32.mrf.mxu0
      %v1127 = vadd.f32 0.0, %v1126
      %1128 = vmatmul.f32.gmra.mxu0 %v808
      %v1129 = vpop.f32.mrf.mxu0
      %v1130 = vadd.f32 0.0, %v1129
      %1131 = vmatmul.f32.gmra.mxu0 %v811
      %v1132 = vpop.f32.mrf.mxu0
      %v1133 = vadd.f32 0.0, %v1132
      %1134 = vmatmul.f32.gmra.mxu0 %v814
      %v1135 = vpop.f32.mrf.mxu0
      %v1136 = vadd.f32 0.0, %v1135
      %1137 = vmatmul.f32.gmra.mxu0 %v817
      %v1138 = vpop.f32.mrf.mxu0
      %v1139 = vadd.f32 0.0, %v1138
      %1140 = vmatmul.f32.gmra.mxu0 %v820
      %v1141 = vpop.f32.mrf.mxu0
      %v1142 = vadd.f32 0.0, %v1141
      %1143 = vmatmul.f32.gmra.mxu0 %v823
      %v1144 = vpop.f32.mrf.mxu0
      %v1145 = vadd.f32 0.0, %v1144
      %1146 = vmatmul.f32.gmra.mxu0 %v826
      %v1147 = vpop.f32.mrf.mxu0
      %v1148 = vadd.f32 0.0, %v1147
      %1149 = vmatmul.f32.gmra.mxu0 %v829
      %v1150 = vpop.f32.mrf.mxu0
      %v1151 = vadd.f32 0.0, %v1150
      %1152 = vmatmul.f32.gmra.mxu0 %v832
      %v1153 = vpop.f32.mrf.mxu0
      %v1154 = vadd.f32 0.0, %v1153
      %1155 = vmatmul.f32.gmra.mxu0 %v835
      %v1156 = vpop.f32.mrf.mxu0
      %v1157 = vadd.f32 0.0, %v1156
      %1158 = vmatmul.f32.gmra.mxu0 %v838
      %v1159 = vpop.f32.mrf.mxu0
      %v1160 = vadd.f32 0.0, %v1159
      %1161 = vmatmul.f32.gmra.mxu0 %v841
      %v1162 = vpop.f32.mrf.mxu0
      %v1163 = vadd.f32 0.0, %v1162
      %1164 = vmatmul.f32.gmra.mxu0 %v844
      %v1165 = vpop.f32.mrf.mxu0
      %v1166 = vadd.f32 0.0, %v1165
      %1167 = vmatmul.f32.gmra.mxu0 %v847
      %v1168 = vpop.f32.mrf.mxu0
      %v1169 = vadd.f32 0.0, %v1168
      %1170 = vmatmul.f32.gmra.mxu0 %v850
      %v1171 = vpop.f32.mrf.mxu0
      %v1172 = vadd.f32 0.0, %v1171
      %1173 = vmatmul.f32.gmra.mxu0 %v853
      %v1174 = vpop.f32.mrf.mxu0
      %v1175 = vadd.f32 0.0, %v1174
      %1176 = vmatmul.f32.gmra.mxu0 %v856
      %v1177 = vpop.f32.mrf.mxu0
      %v1178 = vadd.f32 0.0, %v1177
      %1179 = vmatmul.f32.gmra.mxu0 %v859
      %v1180 = vpop.f32.mrf.mxu0
      %v1181 = vadd.f32 0.0, %v1180
      %1182 = vmatmul.f32.gmra.mxu0 %v862
      %v1183 = vpop.f32.mrf.mxu0
      %v1184 = vadd.f32 0.0, %v1183
      %1185 = vmatmul.f32.gmra.mxu0 %v865
      %v1186 = vpop.f32.mrf.mxu0
      %v1187 = vadd.f32 0.0, %v1186
      %1188 = vmatmul.f32.gmra.mxu0 %v868
      %v1189 = vpop.f32.mrf.mxu0
      %v1190 = vadd.f32 0.0, %v1189
      %1191 = vmatmul.f32.gmra.mxu0 %v871
      %v1192 = vpop.f32.mrf.mxu0
      %v1193 = vadd.f32 0.0, %v1192
      %1194 = vmatmul.f32.gmra.mxu0 %v874
      %v1195 = vpop.f32.mrf.mxu0
      %v1196 = vadd.f32 0.0, %v1195
      %1197 = vmatmul.f32.gmra.mxu0 %v877
      %v1198 = vpop.f32.mrf.mxu0
      %v1199 = vadd.f32 0.0, %v1198
      %1200 = vmatmul.f32.gmra.mxu0 %v880
      %v1201 = vpop.f32.mrf.mxu0
      %v1202 = vadd.f32 0.0, %v1201
      %1203 = vmatmul.f32.gmra.mxu0 %v883
      %v1204 = vpop.f32.mrf.mxu0
      %v1205 = vadd.f32 0.0, %v1204
      %1206 = vmatmul.f32.gmra.mxu0 %v886
      %v1207 = vpop.f32.mrf.mxu0
      %v1208 = vadd.f32 0.0, %v1207
      %1209 = vmatmul.f32.gmra.mxu0 %v889
      %v1210 = vpop.f32.mrf.mxu0
      %v1211 = vadd.f32 0.0, %v1210
      %1212 = vmatmul.f32.gmra.mxu0 %v892
      %v1213 = vpop.f32.mrf.mxu0
      %v1214 = vadd.f32 0.0, %v1213
      %1215 = vmatmul.f32.gmra.mxu0 %v895
      %v1216 = vpop.f32.mrf.mxu0
      %v1217 = vadd.f32 0.0, %v1216
      %1218 = vmatmul.f32.gmra.mxu0 %v898
      %v1219 = vpop.f32.mrf.mxu0
      %v1220 = vadd.f32 0.0, %v1219
      %1221 = vdwg.mxu0
      %v1222 = vmax.f32 %v1014, %v1127
      %1223 = vmax.xlane.f32.xlu0 %v1222
      %v1224 = vpop.xlane.xlu0 %1223
      %v1225 = vmax.f32 %v1017, %v1130
      %1226 = vmax.xlane.f32.xlu0 %v1225
      %v1227 = vpop.xlane.xlu0 %1226
      %v1228 = vmax.f32 %v1020, %v1133
      %1229 = vmax.xlane.f32.xlu0 %v1228
      %v1230 = vpop.xlane.xlu0 %1229
      %v1231 = vmax.f32 %v1023, %v1136
      %1232 = vmax.xlane.f32.xlu0 %v1231
      %v1233 = vpop.xlane.xlu0 %1232
      %v1234 = vmax.f32 %v1026, %v1139
      %1235 = vmax.xlane.f32.xlu0 %v1234
      %v1236 = vpop.xlane.xlu0 %1235
      %v1237 = vmax.f32 %v1029, %v1142
      %1238 = vmax.xlane.f32.xlu0 %v1237
      %v1239 = vpop.xlane.xlu0 %1238
      %v1240 = vmax.f32 %v1032, %v1145
      %1241 = vmax.xlane.f32.xlu0 %v1240
      %v1242 = vpop.xlane.xlu0 %1241
      %v1243 = vmax.f32 %v1035, %v1148
      %1244 = vmax.xlane.f32.xlu0 %v1243
      %v1245 = vpop.xlane.xlu0 %1244
      %v1246 = vmax.f32 %v1038, %v1151
      %1247 = vmax.xlane.f32.xlu0 %v1246
      %v1248 = vpop.xlane.xlu0 %1247
      %v1249 = vmax.f32 %v1041, %v1154
      %1250 = vmax.xlane.f32.xlu0 %v1249
      %v1251 = vpop.xlane.xlu0 %1250
      %v1252 = vmax.f32 %v1044, %v1157
      %1253 = vmax.xlane.f32.xlu0 %v1252
      %v1254 = vpop.xlane.xlu0 %1253
      %v1255 = vmax.f32 %v1047, %v1160
      %1256 = vmax.xlane.f32.xlu0 %v1255
      %v1257 = vpop.xlane.xlu0 %1256
      %v1258 = vmax.f32 %v1050, %v1163
      %1259 = vmax.xlane.f32.xlu0 %v1258
      %v1260 = vpop.xlane.xlu0 %1259
      %v1261 = vmax.f32 %v1053, %v1166
      %1262 = vmax.xlane.f32.xlu0 %v1261
      %v1263 = vpop.xlane.xlu0 %1262
      %v1264 = vmax.f32 %v1056, %v1169
      %1265 = vmax.xlane.f32.xlu0 %v1264
      %v1266 = vpop.xlane.xlu0 %1265
      %v1267 = vmax.f32 %v1059, %v1172
      %1268 = vmax.xlane.f32.xlu0 %v1267
      %v1269 = vpop.xlane.xlu0 %1268
      %v1270 = vmax.f32 %v1062, %v1175
      %1271 = vmax.xlane.f32.xlu0 %v1270
      %v1272 = vpop.xlane.xlu0 %1271
      %v1273 = vmax.f32 %v1065, %v1178
      %1274 = vmax.xlane.f32.xlu0 %v1273
      %v1275 = vpop.xlane.xlu0 %1274
      %v1276 = vmax.f32 %v1068, %v1181
      %1277 = vmax.xlane.f32.xlu0 %v1276
      %v1278 = vpop.xlane.xlu0 %1277
      %v1279 = vmax.f32 %v1071, %v1184
      %1280 = vmax.xlane.f32.xlu0 %v1279
      %v1281 = vpop.xlane.xlu0 %1280
      %v1282 = vmax.f32 %v1074, %v1187
      %1283 = vmax.xlane.f32.xlu0 %v1282
      %v1284 = vpop.xlane.xlu0 %1283
      %v1285 = vmax.f32 %v1077, %v1190
      %1286 = vmax.xlane.f32.xlu0 %v1285
      %v1287 = vpop.xlane.xlu0 %1286
      %v1288 = vmax.f32 %v1080, %v1193
      %1289 = vmax.xlane.f32.xlu0 %v1288
      %v1290 = vpop.xlane.xlu0 %1289
      %v1291 = vmax.f32 %v1083, %v1196
      %1292 = vmax.xlane.f32.xlu0 %v1291
      %v1293 = vpop.xlane.xlu0 %1292
      %v1294 = vmax.f32 %v1086, %v1199
      %1295 = vmax.xlane.f32.xlu0 %v1294
      %v1296 = vpop.xlane.xlu0 %1295
      %v1297 = vmax.f32 %v1089, %v1202
      %1298 = vmax.xlane.f32.xlu0 %v1297
      %v1299 = vpop.xlane.xlu0 %1298
      %v1300 = vmax.f32 %v1092, %v1205
      %1301 = vmax.xlane.f32.xlu0 %v1300
      %v1302 = vpop.xlane.xlu0 %1301
      %v1303 = vmax.f32 %v1095, %v1208
      %1304 = vmax.xlane.f32.xlu0 %v1303
      %v1305 = vpop.xlane.xlu0 %1304
      %v1306 = vmax.f32 %v1098, %v1211
      %1307 = vmax.xlane.f32.xlu0 %v1306
      %v1308 = vpop.xlane.xlu0 %1307
      %v1309 = vmax.f32 %v1101, %v1214
      %1310 = vmax.xlane.f32.xlu0 %v1309
      %v1311 = vpop.xlane.xlu0 %1310
      %v1312 = vmax.f32 %v1104, %v1217
      %1313 = vmax.xlane.f32.xlu0 %v1312
      %v1314 = vpop.xlane.xlu0 %1313
      %v1315 = vmax.f32 %v1107, %v1220
      %1316 = vmax.xlane.f32.xlu0 %v1315
      %v1317 = vpop.xlane.xlu0 %1316
      %v1318 = vsub.f32 %v1014, %v1224
      %v1319 = vsub.f32 %v1127, %v1224
      %v1320 = vsub.f32 %v1017, %v1227
      %v1321 = vsub.f32 %v1130, %v1227
      %v1322 = vsub.f32 %v1020, %v1230
      %v1323 = vsub.f32 %v1133, %v1230
      %v1324 = vsub.f32 %v1023, %v1233
      %v1325 = vsub.f32 %v1136, %v1233
      %v1326 = vsub.f32 %v1026, %v1236
      %v1327 = vsub.f32 %v1139, %v1236
      %v1328 = vsub.f32 %v1029, %v1239
      %v1329 = vsub.f32 %v1142, %v1239
      %v1330 = vsub.f32 %v1032, %v1242
      %v1331 = vsub.f32 %v1145, %v1242
      %v1332 = vsub.f32 %v1035, %v1245
      %v1333 = vsub.f32 %v1148, %v1245
      %v1334 = vsub.f32 %v1038, %v1248
      %v1335 = vsub.f32 %v1151, %v1248
      %v1336 = vsub.f32 %v1041, %v1251
      %v1337 = vsub.f32 %v1154, %v1251
      %v1338 = vsub.f32 %v1044, %v1254
      %v1339 = vsub.f32 %v1157, %v1254
      %v1340 = vsub.f32 %v1047, %v1257
      %v1341 = vsub.f32 %v1160, %v1257
      %v1342 = vsub.f32 %v1050, %v1260
      %v1343 = vsub.f32 %v1163, %v1260
      %v1344 = vsub.f32 %v1053, %v1263
      %v1345 = vsub.f32 %v1166, %v1263
      %v1346 = vsub.f32 %v1056, %v1266
      %v1347 = vsub.f32 %v1169, %v1266
      %v1348 = vsub.f32 %v1059, %v1269
      %v1349 = vsub.f32 %v1172, %v1269
      %v1350 = vsub.f32 %v1062, %v1272
      %v1351 = vsub.f32 %v1175, %v1272
      %v1352 = vsub.f32 %v1065, %v1275
      %v1353 = vsub.f32 %v1178, %v1275
      %v1354 = vsub.f32 %v1068, %v1278
      %v1355 = vsub.f32 %v1181, %v1278
      %v1356 = vsub.f32 %v1071, %v1281
      %v1357 = vsub.f32 %v1184, %v1281
      %v1358 = vsub.f32 %v1074, %v1284
      %v1359 = vsub.f32 %v1187, %v1284
      %v1360 = vsub.f32 %v1077, %v1287
      %v1361 = vsub.f32 %v1190, %v1287
      %v1362 = vsub.f32 %v1080, %v1290
      %v1363 = vsub.f32 %v1193, %v1290
      %v1364 = vsub.f32 %v1083, %v1293
      %v1365 = vsub.f32 %v1196, %v1293
      %v1366 = vsub.f32 %v1086, %v1296
      %v1367 = vsub.f32 %v1199, %v1296
      %v1368 = vsub.f32 %v1089, %v1299
      %v1369 = vsub.f32 %v1202, %v1299
      %v1370 = vsub.f32 %v1092, %v1302
      %v1371 = vsub.f32 %v1205, %v1302
      %v1372 = vsub.f32 %v1095, %v1305
      %v1373 = vsub.f32 %v1208, %v1305
      %v1374 = vsub.f32 %v1098, %v1308
      %v1375 = vsub.f32 %v1211, %v1308
      %v1376 = vsub.f32 %v1101, %v1311
      %v1377 = vsub.f32 %v1214, %v1311
      %v1378 = vsub.f32 %v1104, %v1314
      %v1379 = vsub.f32 %v1217, %v1314
      %v1380 = vsub.f32 %v1107, %v1317
      %v1381 = vsub.f32 %v1220, %v1317
      %v1382 = vmul.f32 %v1318, 1.442695
      %v1383 = vpow.pop %v1382
      %v1384 = vmul.f32 %v1319, 1.442695
      %v1385 = vpow.pop %v1384
      %v1386 = vmul.f32 %v1320, 1.442695
      %v1387 = vpow.pop %v1386
      %v1388 = vmul.f32 %v1321, 1.442695
      %v1389 = vpow.pop %v1388
      %v1390 = vmul.f32 %v1322, 1.442695
      %v1391 = vpow.pop %v1390
      %v1392 = vmul.f32 %v1323, 1.442695
      %v1393 = vpow.pop %v1392
      %v1394 = vmul.f32 %v1324, 1.442695
      %v1395 = vpow.pop %v1394
      %v1396 = vmul.f32 %v1325, 1.442695
      %v1397 = vpow.pop %v1396
      %v1398 = vmul.f32 %v1326, 1.442695
      %v1399 = vpow.pop %v1398
      %v1400 = vmul.f32 %v1327, 1.442695
      %v1401 = vpow.pop %v1400
      %v1402 = vmul.f32 %v1328, 1.442695
      %v1403 = vpow.pop %v1402
      %v1404 = vmul.f32 %v1329, 1.442695
      %v1405 = vpow.pop %v1404
      %v1406 = vmul.f32 %v1330, 1.442695
      %v1407 = vpow.pop %v1406
      %v1408 = vmul.f32 %v1331, 1.442695
      %v1409 = vpow.pop %v1408
      %v1410 = vmul.f32 %v1332, 1.442695
      %v1411 = vpow.pop %v1410
      %v1412 = vmul.f32 %v1333, 1.442695
      %v1413 = vpow.pop %v1412
      %v1414 = vmul.f32 %v1334, 1.442695
      %v1415 = vpow.pop %v1414
      %v1416 = vmul.f32 %v1335, 1.442695
      %v1417 = vpow.pop %v1416
      %v1418 = vmul.f32 %v1336, 1.442695
      %v1419 = vpow.pop %v1418
      %v1420 = vmul.f32 %v1337, 1.442695
      %v1421 = vpow.pop %v1420
      %v1422 = vmul.f32 %v1338, 1.442695
      %v1423 = vpow.pop %v1422
      %v1424 = vmul.f32 %v1339, 1.442695
      %v1425 = vpow.pop %v1424
      %v1426 = vmul.f32 %v1340, 1.442695
      %v1427 = vpow.pop %v1426
      %v1428 = vmul.f32 %v1341, 1.442695
      %v1429 = vpow.pop %v1428
      %v1430 = vmul.f32 %v1342, 1.442695
      %v1431 = vpow.pop %v1430
      %v1432 = vmul.f32 %v1343, 1.442695
      %v1433 = vpow.pop %v1432
      %v1434 = vmul.f32 %v1344, 1.442695
      %v1435 = vpow.pop %v1434
      %v1436 = vmul.f32 %v1345, 1.442695
      %v1437 = vpow.pop %v1436
      %v1438 = vmul.f32 %v1346, 1.442695
      %v1439 = vpow.pop %v1438
      %v1440 = vmul.f32 %v1347, 1.442695
      %v1441 = vpow.pop %v1440
      %v1442 = vmul.f32 %v1348, 1.442695
      %v1443 = vpow.pop %v1442
      %v1444 = vmul.f32 %v1349, 1.442695
      %v1445 = vpow.pop %v1444
      %v1446 = vmul.f32 %v1350, 1.442695
      %v1447 = vpow.pop %v1446
      %v1448 = vmul.f32 %v1351, 1.442695
      %v1449 = vpow.pop %v1448
      %v1450 = vmul.f32 %v1352, 1.442695
      %v1451 = vpow.pop %v1450
      %v1452 = vmul.f32 %v1353, 1.442695
      %v1453 = vpow.pop %v1452
      %v1454 = vmul.f32 %v1354, 1.442695
      %v1455 = vpow.pop %v1454
      %v1456 = vmul.f32 %v1355, 1.442695
      %v1457 = vpow.pop %v1456
      %v1458 = vmul.f32 %v1356, 1.442695
      %v1459 = vpow.pop %v1458
      %v1460 = vmul.f32 %v1357, 1.442695
      %v1461 = vpow.pop %v1460
      %v1462 = vmul.f32 %v1358, 1.442695
      %v1463 = vpow.pop %v1462
      %v1464 = vmul.f32 %v1359, 1.442695
      %v1465 = vpow.pop %v1464
      %v1466 = vmul.f32 %v1360, 1.442695
      %v1467 = vpow.pop %v1466
      %v1468 = vmul.f32 %v1361, 1.442695
      %v1469 = vpow.pop %v1468
      %v1470 = vmul.f32 %v1362, 1.442695
      %v1471 = vpow.pop %v1470
      %v1472 = vmul.f32 %v1363, 1.442695
      %v1473 = vpow.pop %v1472
      %v1474 = vmul.f32 %v1364, 1.442695
      %v1475 = vpow.pop %v1474
      %v1476 = vmul.f32 %v1365, 1.442695
      %v1477 = vpow.pop %v1476
      %v1478 = vmul.f32 %v1366, 1.442695
      %v1479 = vpow.pop %v1478
      %v1480 = vmul.f32 %v1367, 1.442695
      %v1481 = vpow.pop %v1480
      %v1482 = vmul.f32 %v1368, 1.442695
      %v1483 = vpow.pop %v1482
      %v1484 = vmul.f32 %v1369, 1.442695
      %v1485 = vpow.pop %v1484
      %v1486 = vmul.f32 %v1370, 1.442695
      %v1487 = vpow.pop %v1486
      %v1488 = vmul.f32 %v1371, 1.442695
      %v1489 = vpow.pop %v1488
      %v1490 = vmul.f32 %v1372, 1.442695
      %v1491 = vpow.pop %v1490
      %v1492 = vmul.f32 %v1373, 1.442695
      %v1493 = vpow.pop %v1492
      %v1494 = vmul.f32 %v1374, 1.442695
      %v1495 = vpow.pop %v1494
      %v1496 = vmul.f32 %v1375, 1.442695
      %v1497 = vpow.pop %v1496
      %v1498 = vmul.f32 %v1376, 1.442695
      %v1499 = vpow.pop %v1498
      %v1500 = vmul.f32 %v1377, 1.442695
      %v1501 = vpow.pop %v1500
      %v1502 = vmul.f32 %v1378, 1.442695
      %v1503 = vpow.pop %v1502
      %v1504 = vmul.f32 %v1379, 1.442695
      %v1505 = vpow.pop %v1504
      %v1506 = vmul.f32 %v1380, 1.442695
      %v1507 = vpow.pop %v1506
      %v1508 = vmul.f32 %v1381, 1.442695
      %v1509 = vpow.pop %v1508
      %v1510 = vadd.f32 %v1383, %v1385
      %1511 = vadd.xlane.f32.xlu0 %v1510
      %v1512 = vpop.xlane.xlu0 %1511
      %v1513 = vadd.f32 %v1387, %v1389
      %1514 = vadd.xlane.f32.xlu0 %v1513
      %v1515 = vpop.xlane.xlu0 %1514
      %v1516 = vadd.f32 %v1391, %v1393
      %1517 = vadd.xlane.f32.xlu0 %v1516
      %v1518 = vpop.xlane.xlu0 %1517
      %v1519 = vadd.f32 %v1395, %v1397
      %1520 = vadd.xlane.f32.xlu0 %v1519
      %v1521 = vpop.xlane.xlu0 %1520
      %v1522 = vadd.f32 %v1399, %v1401
      %1523 = vadd.xlane.f32.xlu0 %v1522
      %v1524 = vpop.xlane.xlu0 %1523
      %v1525 = vadd.f32 %v1403, %v1405
      %1526 = vadd.xlane.f32.xlu0 %v1525
      %v1527 = vpop.xlane.xlu0 %1526
      %v1528 = vadd.f32 %v1407, %v1409
      %1529 = vadd.xlane.f32.xlu0 %v1528
      %v1530 = vpop.xlane.xlu0 %1529
      %v1531 = vadd.f32 %v1411, %v1413
      %1532 = vadd.xlane.f32.xlu0 %v1531
      %v1533 = vpop.xlane.xlu0 %1532
      %v1534 = vadd.f32 %v1415, %v1417
      %1535 = vadd.xlane.f32.xlu0 %v1534
      %v1536 = vpop.xlane.xlu0 %1535
      %v1537 = vadd.f32 %v1419, %v1421
      %1538 = vadd.xlane.f32.xlu0 %v1537
      %v1539 = vpop.xlane.xlu0 %1538
      %v1540 = vadd.f32 %v1423, %v1425
      %1541 = vadd.xlane.f32.xlu0 %v1540
      %v1542 = vpop.xlane.xlu0 %1541
      %v1543 = vadd.f32 %v1427, %v1429
      %1544 = vadd.xlane.f32.xlu0 %v1543
      %v1545 = vpop.xlane.xlu0 %1544
      %v1546 = vadd.f32 %v1431, %v1433
      %1547 = vadd.xlane.f32.xlu0 %v1546
      %v1548 = vpop.xlane.xlu0 %1547
      %v1549 = vadd.f32 %v1435, %v1437
      %1550 = vadd.xlane.f32.xlu0 %v1549
      %v1551 = vpop.xlane.xlu0 %1550
      %v1552 = vadd.f32 %v1439, %v1441
      %1553 = vadd.xlane.f32.xlu0 %v1552
      %v1554 = vpop.xlane.xlu0 %1553
      %v1555 = vadd.f32 %v1443, %v1445
      %1556 = vadd.xlane.f32.xlu0 %v1555
      %v1557 = vpop.xlane.xlu0 %1556
      %v1558 = vadd.f32 %v1447, %v1449
      %1559 = vadd.xlane.f32.xlu0 %v1558
      %v1560 = vpop.xlane.xlu0 %1559
      %v1561 = vadd.f32 %v1451, %v1453
      %1562 = vadd.xlane.f32.xlu0 %v1561
      %v1563 = vpop.xlane.xlu0 %1562
      %v1564 = vadd.f32 %v1455, %v1457
      %1565 = vadd.xlane.f32.xlu0 %v1564
      %v1566 = vpop.xlane.xlu0 %1565
      %v1567 = vadd.f32 %v1459, %v1461
      %1568 = vadd.xlane.f32.xlu0 %v1567
      %v1569 = vpop.xlane.xlu0 %1568
      %v1570 = vadd.f32 %v1463, %v1465
      %1571 = vadd.xlane.f32.xlu0 %v1570
      %v1572 = vpop.xlane.xlu0 %1571
      %v1573 = vadd.f32 %v1467, %v1469
      %1574 = vadd.xlane.f32.xlu0 %v1573
      %v1575 = vpop.xlane.xlu0 %1574
      %v1576 = vadd.f32 %v1471, %v1473
      %1577 = vadd.xlane.f32.xlu0 %v1576
      %v1578 = vpop.xlane.xlu0 %1577
      %v1579 = vadd.f32 %v1475, %v1477
      %1580 = vadd.xlane.f32.xlu0 %v1579
      %v1581 = vpop.xlane.xlu0 %1580
      %v1582 = vadd.f32 %v1479, %v1481
      %1583 = vadd.xlane.f32.xlu0 %v1582
      %v1584 = vpop.xlane.xlu0 %1583
      %v1585 = vadd.f32 %v1483, %v1485
      %1586 = vadd.xlane.f32.xlu0 %v1585
      %v1587 = vpop.xlane.xlu0 %1586
      %v1588 = vadd.f32 %v1487, %v1489
      %1589 = vadd.xlane.f32.xlu0 %v1588
      %v1590 = vpop.xlane.xlu0 %1589
      %v1591 = vadd.f32 %v1491, %v1493
      %1592 = vadd.xlane.f32.xlu0 %v1591
      %v1593 = vpop.xlane.xlu0 %1592
      %v1594 = vadd.f32 %v1495, %v1497
      %1595 = vadd.xlane.f32.xlu0 %v1594
      %v1596 = vpop.xlane.xlu0 %1595
      %v1597 = vadd.f32 %v1499, %v1501
      %1598 = vadd.xlane.f32.xlu0 %v1597
      %v1599 = vpop.xlane.xlu0 %1598
      %v1600 = vadd.f32 %v1503, %v1505
      %1601 = vadd.xlane.f32.xlu0 %v1600
      %v1602 = vpop.xlane.xlu0 %1601
      %v1603 = vadd.f32 %v1507, %v1509
      %1604 = vadd.xlane.f32.xlu0 %v1603
      %v1605 = vpop.xlane.xlu0 %1604
      %v1606 = vrcp.pop %v1512
      %v1607 = vrcp.pop %v1515
      %v1608 = vrcp.pop %v1518
      %v1609 = vrcp.pop %v1521
      %v1610 = vrcp.pop %v1524
      %v1611 = vrcp.pop %v1527
      %v1612 = vrcp.pop %v1530
      %v1613 = vrcp.pop %v1533
      %v1614 = vrcp.pop %v1536
      %v1615 = vrcp.pop %v1539
      %v1616 = vrcp.pop %v1542
      %v1617 = vrcp.pop %v1545
      %v1618 = vrcp.pop %v1548
      %v1619 = vrcp.pop %v1551
      %v1620 = vrcp.pop %v1554
      %v1621 = vrcp.pop %v1557
      %v1622 = vrcp.pop %v1560
      %v1623 = vrcp.pop %v1563
      %v1624 = vrcp.pop %v1566
      %v1625 = vrcp.pop %v1569
      %v1626 = vrcp.pop %v1572
      %v1627 = vrcp.pop %v1575
      %v1628 = vrcp.pop %v1578
      %v1629 = vrcp.pop %v1581
      %v1630 = vrcp.pop %v1584
      %v1631 = vrcp.pop %v1587
      %v1632 = vrcp.pop %v1590
      %v1633 = vrcp.pop %v1593
      %v1634 = vrcp.pop %v1596
      %v1635 = vrcp.pop %v1599
      %v1636 = vrcp.pop %v1602
      %v1637 = vrcp.pop %v1605
      %v1638 = vmul.f32 %v1383, %v1606
      %v1639 = vmul.f32 %v1385, %v1606
      %v1640 = vmul.f32 %v1387, %v1607
      %v1641 = vmul.f32 %v1389, %v1607
      %v1642 = vmul.f32 %v1391, %v1608
      %v1643 = vmul.f32 %v1393, %v1608
      %v1644 = vmul.f32 %v1395, %v1609
      %v1645 = vmul.f32 %v1397, %v1609
      %v1646 = vmul.f32 %v1399, %v1610
      %v1647 = vmul.f32 %v1401, %v1610
      %v1648 = vmul.f32 %v1403, %v1611
      %v1649 = vmul.f32 %v1405, %v1611
      %v1650 = vmul.f32 %v1407, %v1612
      %v1651 = vmul.f32 %v1409, %v1612
      %v1652 = vmul.f32 %v1411, %v1613
      %v1653 = vmul.f32 %v1413, %v1613
      %v1654 = vmul.f32 %v1415, %v1614
      %v1655 = vmul.f32 %v1417, %v1614
      %v1656 = vmul.f32 %v1419, %v1615
      %v1657 = vmul.f32 %v1421, %v1615
      %v1658 = vmul.f32 %v1423, %v1616
      %v1659 = vmul.f32 %v1425, %v1616
      %v1660 = vmul.f32 %v1427, %v1617
      %v1661 = vmul.f32 %v1429, %v1617
      %v1662 = vmul.f32 %v1431, %v1618
      %v1663 = vmul.f32 %v1433, %v1618
      %v1664 = vmul.f32 %v1435, %v1619
      %v1665 = vmul.f32 %v1437, %v1619
      %v1666 = vmul.f32 %v1439, %v1620
      %v1667 = vmul.f32 %v1441, %v1620
      %v1668 = vmul.f32 %v1443, %v1621
      %v1669 = vmul.f32 %v1445, %v1621
      %v1670 = vmul.f32 %v1447, %v1622
      %v1671 = vmul.f32 %v1449, %v1622
      %v1672 = vmul.f32 %v1451, %v1623
      %v1673 = vmul.f32 %v1453, %v1623
      %v1674 = vmul.f32 %v1455, %v1624
      %v1675 = vmul.f32 %v1457, %v1624
      %v1676 = vmul.f32 %v1459, %v1625
      %v1677 = vmul.f32 %v1461, %v1625
      %v1678 = vmul.f32 %v1463, %v1626
      %v1679 = vmul.f32 %v1465, %v1626
      %v1680 = vmul.f32 %v1467, %v1627
      %v1681 = vmul.f32 %v1469, %v1627
      %v1682 = vmul.f32 %v1471, %v1628
      %v1683 = vmul.f32 %v1473, %v1628
      %v1684 = vmul.f32 %v1475, %v1629
      %v1685 = vmul.f32 %v1477, %v1629
      %v1686 = vmul.f32 %v1479, %v1630
      %v1687 = vmul.f32 %v1481, %v1630
      %v1688 = vmul.f32 %v1483, %v1631
      %v1689 = vmul.f32 %v1485, %v1631
      %v1690 = vmul.f32 %v1487, %v1632
      %v1691 = vmul.f32 %v1489, %v1632
      %v1692 = vmul.f32 %v1491, %v1633
      %v1693 = vmul.f32 %v1493, %v1633
      %v1694 = vmul.f32 %v1495, %v1634
      %v1695 = vmul.f32 %v1497, %v1634
      %v1696 = vmul.f32 %v1499, %v1635
      %v1697 = vmul.f32 %v1501, %v1635
      %v1698 = vmul.f32 %v1503, %v1636
      %v1699 = vmul.f32 %v1505, %v1636
      %v1700 = vmul.f32 %v1507, %v1637
      %v1701 = vmul.f32 %v1509, %v1637
      %1702 = vmatpush.msra.mxu0 %v753
      %1703 = vmatpush.msra.mxu0 %v750
      %1704 = vmatpush.msra.mxu0 %v747
      %1705 = vmatpush.msra.mxu0 %v744
      %1706 = vmatpush.msra.mxu0 %v741
      %1707 = vmatpush.msra.mxu0 %v738
      %1708 = vmatpush.msra.mxu0 %v735
      %1709 = vmatpush.msra.mxu0 %v732
      %1710 = vmatpush.msra.mxu0 %v729
      %1711 = vmatpush.msra.mxu0 %v726
      %1712 = vmatpush.msra.mxu0 %v723
      %1713 = vmatpush.msra.mxu0 %v720
      %1714 = vmatpush.msra.mxu0 %v717
      %1715 = vmatpush.msra.mxu0 %v714
      %1716 = vmatpush.msra.mxu0 %v711
      %1717 = vmatpush.msra.mxu0 %v708
      %1718 = vmatmul.f32.gmra.mxu0 %v1638
      %v1719 = vpop.f32.mrf.mxu0
      %v1720 = vadd.f32 0.0, %v1719
      %1721 = vmatmul.f32.gmra.mxu0 %v1640
      %v1722 = vpop.f32.mrf.mxu0
      %v1723 = vadd.f32 0.0, %v1722
      %1724 = vmatmul.f32.gmra.mxu0 %v1642
      %v1725 = vpop.f32.mrf.mxu0
      %v1726 = vadd.f32 0.0, %v1725
      %1727 = vmatmul.f32.gmra.mxu0 %v1644
      %v1728 = vpop.f32.mrf.mxu0
      %v1729 = vadd.f32 0.0, %v1728
      %1730 = vmatmul.f32.gmra.mxu0 %v1646
      %v1731 = vpop.f32.mrf.mxu0
      %v1732 = vadd.f32 0.0, %v1731
      %1733 = vmatmul.f32.gmra.mxu0 %v1648
      %v1734 = vpop.f32.mrf.mxu0
      %v1735 = vadd.f32 0.0, %v1734
      %1736 = vmatmul.f32.gmra.mxu0 %v1650
      %v1737 = vpop.f32.mrf.mxu0
      %v1738 = vadd.f32 0.0, %v1737
      %1739 = vmatmul.f32.gmra.mxu0 %v1652
      %v1740 = vpop.f32.mrf.mxu0
      %v1741 = vadd.f32 0.0, %v1740
      %1742 = vmatmul.f32.gmra.mxu0 %v1654
      %v1743 = vpop.f32.mrf.mxu0
      %v1744 = vadd.f32 0.0, %v1743
      %1745 = vmatmul.f32.gmra.mxu0 %v1656
      %v1746 = vpop.f32.mrf.mxu0
      %v1747 = vadd.f32 0.0, %v1746
      %1748 = vmatmul.f32.gmra.mxu0 %v1658
      %v1749 = vpop.f32.mrf.mxu0
      %v1750 = vadd.f32 0.0, %v1749
      %1751 = vmatmul.f32.gmra.mxu0 %v1660
      %v1752 = vpop.f32.mrf.mxu0
      %v1753 = vadd.f32 0.0, %v1752
      %1754 = vmatmul.f32.gmra.mxu0 %v1662
      %v1755 = vpop.f32.mrf.mxu0
      %v1756 = vadd.f32 0.0, %v1755
      %1757 = vmatmul.f32.gmra.mxu0 %v1664
      %v1758 = vpop.f32.mrf.mxu0
      %v1759 = vadd.f32 0.0, %v1758
      %1760 = vmatmul.f32.gmra.mxu0 %v1666
      %v1761 = vpop.f32.mrf.mxu0
      %v1762 = vadd.f32 0.0, %v1761
      %1763 = vmatmul.f32.gmra.mxu0 %v1668
      %v1764 = vpop.f32.mrf.mxu0
      %v1765 = vadd.f32 0.0, %v1764
      %1766 = vmatmul.f32.gmra.mxu0 %v1670
      %v1767 = vpop.f32.mrf.mxu0
      %v1768 = vadd.f32 0.0, %v1767
      %1769 = vmatmul.f32.gmra.mxu0 %v1672
      %v1770 = vpop.f32.mrf.mxu0
      %v1771 = vadd.f32 0.0, %v1770
      %1772 = vmatmul.f32.gmra.mxu0 %v1674
      %v1773 = vpop.f32.mrf.mxu0
      %v1774 = vadd.f32 0.0, %v1773
      %1775 = vmatmul.f32.gmra.mxu0 %v1676
      %v1776 = vpop.f32.mrf.mxu0
      %v1777 = vadd.f32 0.0, %v1776
      %1778 = vmatmul.f32.gmra.mxu0 %v1678
      %v1779 = vpop.f32.mrf.mxu0
      %v1780 = vadd.f32 0.0, %v1779
      %1781 = vmatmul.f32.gmra.mxu0 %v1680
      %v1782 = vpop.f32.mrf.mxu0
      %v1783 = vadd.f32 0.0, %v1782
      %1784 = vmatmul.f32.gmra.mxu0 %v1682
      %v1785 = vpop.f32.mrf.mxu0
      %v1786 = vadd.f32 0.0, %v1785
      %1787 = vmatmul.f32.gmra.mxu0 %v1684
      %v1788 = vpop.f32.mrf.mxu0
      %v1789 = vadd.f32 0.0, %v1788
      %1790 = vmatmul.f32.gmra.mxu0 %v1686
      %v1791 = vpop.f32.mrf.mxu0
      %v1792 = vadd.f32 0.0, %v1791
      %1793 = vmatmul.f32.gmra.mxu0 %v1688
      %v1794 = vpop.f32.mrf.mxu0
      %v1795 = vadd.f32 0.0, %v1794
      %1796 = vmatmul.f32.gmra.mxu0 %v1690
      %v1797 = vpop.f32.mrf.mxu0
      %v1798 = vadd.f32 0.0, %v1797
      %1799 = vmatmul.f32.gmra.mxu0 %v1692
      %v1800 = vpop.f32.mrf.mxu0
      %v1801 = vadd.f32 0.0, %v1800
      %1802 = vmatmul.f32.gmra.mxu0 %v1694
      %v1803 = vpop.f32.mrf.mxu0
      %v1804 = vadd.f32 0.0, %v1803
      %1805 = vmatmul.f32.gmra.mxu0 %v1696
      %v1806 = vpop.f32.mrf.mxu0
      %v1807 = vadd.f32 0.0, %v1806
      %1808 = vmatmul.f32.gmra.mxu0 %v1698
      %v1809 = vpop.f32.mrf.mxu0
      %v1810 = vadd.f32 0.0, %v1809
      %1811 = vmatmul.f32.gmra.mxu0 %v1700
      %v1812 = vpop.f32.mrf.mxu0
      %v1813 = vadd.f32 0.0, %v1812
      %1814 = vdwg.mxu0
      %1815 = vmatpush.msra.mxu0 %v801
      %1816 = vmatpush.msra.mxu0 %v798
      %1817 = vmatpush.msra.mxu0 %v795
      %1818 = vmatpush.msra.mxu0 %v792
      %1819 = vmatpush.msra.mxu0 %v789
      %1820 = vmatpush.msra.mxu0 %v786
      %1821 = vmatpush.msra.mxu0 %v783
      %1822 = vmatpush.msra.mxu0 %v780
      %1823 = vmatpush.msra.mxu0 %v777
      %1824 = vmatpush.msra.mxu0 %v774
      %1825 = vmatpush.msra.mxu0 %v771
      %1826 = vmatpush.msra.mxu0 %v768
      %1827 = vmatpush.msra.mxu0 %v765
      %1828 = vmatpush.msra.mxu0 %v762
      %1829 = vmatpush.msra.mxu0 %v759
      %1830 = vmatpush.msra.mxu0 %v756
      %1831 = vmatmul.f32.gmra.mxu0 %v1639
      %v1832 = vpop.f32.mrf.mxu0
      %v1833 = vadd.f32 %v1720, %v1832
      %1834 = vmatmul.f32.gmra.mxu0 %v1641
      %v1835 = vpop.f32.mrf.mxu0
      %v1836 = vadd.f32 %v1723, %v1835
      %1837 = vmatmul.f32.gmra.mxu0 %v1643
      %v1838 = vpop.f32.mrf.mxu0
      %v1839 = vadd.f32 %v1726, %v1838
      %1840 = vmatmul.f32.gmra.mxu0 %v1645
      %v1841 = vpop.f32.mrf.mxu0
      %v1842 = vadd.f32 %v1729, %v1841
      %1843 = vmatmul.f32.gmra.mxu0 %v1647
      %v1844 = vpop.f32.mrf.mxu0
      %v1845 = vadd.f32 %v1732, %v1844
      %1846 = vmatmul.f32.gmra.mxu0 %v1649
      %v1847 = vpop.f32.mrf.mxu0
      %v1848 = vadd.f32 %v1735, %v1847
      %1849 = vmatmul.f32.gmra.mxu0 %v1651
      %v1850 = vpop.f32.mrf.mxu0
      %v1851 = vadd.f32 %v1738, %v1850
      %1852 = vmatmul.f32.gmra.mxu0 %v1653
      %v1853 = vpop.f32.mrf.mxu0
      %v1854 = vadd.f32 %v1741, %v1853
      %1855 = vmatmul.f32.gmra.mxu0 %v1655
      %v1856 = vpop.f32.mrf.mxu0
      %v1857 = vadd.f32 %v1744, %v1856
      %1858 = vmatmul.f32.gmra.mxu0 %v1657
      %v1859 = vpop.f32.mrf.mxu0
      %v1860 = vadd.f32 %v1747, %v1859
      %1861 = vmatmul.f32.gmra.mxu0 %v1659
      %v1862 = vpop.f32.mrf.mxu0
      %v1863 = vadd.f32 %v1750, %v1862
      %1864 = vmatmul.f32.gmra.mxu0 %v1661
      %v1865 = vpop.f32.mrf.mxu0
      %v1866 = vadd.f32 %v1753, %v1865
      %1867 = vmatmul.f32.gmra.mxu0 %v1663
      %v1868 = vpop.f32.mrf.mxu0
      %v1869 = vadd.f32 %v1756, %v1868
      %1870 = vmatmul.f32.gmra.mxu0 %v1665
      %v1871 = vpop.f32.mrf.mxu0
      %v1872 = vadd.f32 %v1759, %v1871
      %1873 = vmatmul.f32.gmra.mxu0 %v1667
      %v1874 = vpop.f32.mrf.mxu0
      %v1875 = vadd.f32 %v1762, %v1874
      %1876 = vmatmul.f32.gmra.mxu0 %v1669
      %v1877 = vpop.f32.mrf.mxu0
      %v1878 = vadd.f32 %v1765, %v1877
      %1879 = vmatmul.f32.gmra.mxu0 %v1671
      %v1880 = vpop.f32.mrf.mxu0
      %v1881 = vadd.f32 %v1768, %v1880
      %1882 = vmatmul.f32.gmra.mxu0 %v1673
      %v1883 = vpop.f32.mrf.mxu0
      %v1884 = vadd.f32 %v1771, %v1883
      %1885 = vmatmul.f32.gmra.mxu0 %v1675
      %v1886 = vpop.f32.mrf.mxu0
      %v1887 = vadd.f32 %v1774, %v1886
      %1888 = vmatmul.f32.gmra.mxu0 %v1677
      %v1889 = vpop.f32.mrf.mxu0
      %v1890 = vadd.f32 %v1777, %v1889
      %1891 = vmatmul.f32.gmra.mxu0 %v1679
      %v1892 = vpop.f32.mrf.mxu0
      %v1893 = vadd.f32 %v1780, %v1892
      %1894 = vmatmul.f32.gmra.mxu0 %v1681
      %v1895 = vpop.f32.mrf.mxu0
      %v1896 = vadd.f32 %v1783, %v1895
      %1897 = vmatmul.f32.gmra.mxu0 %v1683
      %v1898 = vpop.f32.mrf.mxu0
      %v1899 = vadd.f32 %v1786, %v1898
      %1900 = vmatmul.f32.gmra.mxu0 %v1685
      %v1901 = vpop.f32.mrf.mxu0
      %v1902 = vadd.f32 %v1789, %v1901
      %1903 = vmatmul.f32.gmra.mxu0 %v1687
      %v1904 = vpop.f32.mrf.mxu0
      %v1905 = vadd.f32 %v1792, %v1904
      %1906 = vmatmul.f32.gmra.mxu0 %v1689
      %v1907 = vpop.f32.mrf.mxu0
      %v1908 = vadd.f32 %v1795, %v1907
      %1909 = vmatmul.f32.gmra.mxu0 %v1691
      %v1910 = vpop.f32.mrf.mxu0
      %v1911 = vadd.f32 %v1798, %v1910
      %1912 = vmatmul.f32.gmra.mxu0 %v1693
      %v1913 = vpop.f32.mrf.mxu0
      %v1914 = vadd.f32 %v1801, %v1913
      %1915 = vmatmul.f32.gmra.mxu0 %v1695
      %v1916 = vpop.f32.mrf.mxu0
      %v1917 = vadd.f32 %v1804, %v1916
      %1918 = vmatmul.f32.gmra.mxu0 %v1697
      %v1919 = vpop.f32.mrf.mxu0
      %v1920 = vadd.f32 %v1807, %v1919
      %1921 = vmatmul.f32.gmra.mxu0 %v1699
      %v1922 = vpop.f32.mrf.mxu0
      %v1923 = vadd.f32 %v1810, %v1922
      %1924 = vmatmul.f32.gmra.mxu0 %v1701
      %v1925 = vpop.f32.mrf.mxu0
      %v1926 = vadd.f32 %v1813, %v1925
      %1927 = vdwg.mxu0
      %s1928 = sld [smem:[#allocation2]]
      %v1929 = vstv %s1928
      %v1930 = vmul.f32 %v1929, %v1833
      %v1931 = vmul.f32 %v1929, %v1836
      %v1932 = vmul.f32 %v1929, %v1839
      %v1933 = vmul.f32 %v1929, %v1842
      %v1934 = vmul.f32 %v1929, %v1845
      %v1935 = vmul.f32 %v1929, %v1848
      %v1936 = vmul.f32 %v1929, %v1851
      %v1937 = vmul.f32 %v1929, %v1854
      %v1938 = vmul.f32 %v1929, %v1857
      %v1939 = vmul.f32 %v1929, %v1860
      %v1940 = vmul.f32 %v1929, %v1863
      %v1941 = vmul.f32 %v1929, %v1866
      %v1942 = vmul.f32 %v1929, %v1869
      %v1943 = vmul.f32 %v1929, %v1872
      %v1944 = vmul.f32 %v1929, %v1875
      %v1945 = vmul.f32 %v1929, %v1878
      %v1946 = vmul.f32 %v1929, %v1881
      %v1947 = vmul.f32 %v1929, %v1884
      %v1948 = vmul.f32 %v1929, %v1887
      %v1949 = vmul.f32 %v1929, %v1890
      %v1950 = vmul.f32 %v1929, %v1893
      %v1951 = vmul.f32 %v1929, %v1896
      %v1952 = vmul.f32 %v1929, %v1899
      %v1953 = vmul.f32 %v1929, %v1902
      %v1954 = vmul.f32 %v1929, %v1905
      %v1955 = vmul.f32 %v1929, %v1908
      %v1956 = vmul.f32 %v1929, %v1911
      %v1957 = vmul.f32 %v1929, %v1914
      %v1958 = vmul.f32 %v1929, %v1917
      %v1959 = vmul.f32 %v1929, %v1920
      %v1960 = vmul.f32 %v1929, %v1923
      %v1961 = vmul.f32 %v1929, %v1926
      %v1962 = vadd.f32 %v1930, %v307
      %v1963 = vadd.f32 %v1931, %v308
      %v1964 = vadd.f32 %v1932, %v309
      %v1965 = vadd.f32 %v1933, %v310
      %v1966 = vadd.f32 %v1934, %v311
      %v1967 = vadd.f32 %v1935, %v312
      %v1968 = vadd.f32 %v1936, %v313
      %v1969 = vadd.f32 %v1937, %v314
      %v1970 = vadd.f32 %v1938, %v315
      %v1971 = vadd.f32 %v1939, %v316
      %v1972 = vadd.f32 %v1940, %v317
      %v1973 = vadd.f32 %v1941, %v318
      %v1974 = vadd.f32 %v1942, %v319
      %v1975 = vadd.f32 %v1943, %v320
      %v1976 = vadd.f32 %v1944, %v321
      %v1977 = vadd.f32 %v1945, %v322
      %v1978 = vadd.f32 %v1946, %v323
      %v1979 = vadd.f32 %v1947, %v324
      %v1980 = vadd.f32 %v1948, %v325
      %v1981 = vadd.f32 %v1949, %v326
      %v1982 = vadd.f32 %v1950, %v327
      %v1983 = vadd.f32 %v1951, %v328
      %v1984 = vadd.f32 %v1952, %v329
      %v1985 = vadd.f32 %v1953, %v330
      %v1986 = vadd.f32 %v1954, %v331
      %v1987 = vadd.f32 %v1955, %v332
      %v1988 = vadd.f32 %v1956, %v333
      %v1989 = vadd.f32 %v1957, %v334
      %v1990 = vadd.f32 %v1958, %v335
      %v1991 = vadd.f32 %v1959, %v336
      %v1992 = vadd.f32 %v1960, %v337
      %v1993 = vadd.f32 %v1961, %v338
      %1994 = vst.msk [vmem:[%s306] sm:$0xff] %vm344, %v1962
      %1995 = vst.msk [vmem:[%s306 + $0x8] sm:$0xff] %vm344, %v1963
      %1996 = vst.msk [vmem:[%s306 + $0x10] sm:$0xff] %vm344, %v1964
      %1997 = vst.msk [vmem:[%s306 + $0x18] sm:$0xff] %vm344, %v1965
      %1998 = vst.msk [vmem:[%s306 + $0x20] sm:$0xff] %vm344, %v1966
      %1999 = vst.msk [vmem:[%s306 + $0x28] sm:$0xff] %vm344, %v1967
      %2000 = vst.msk [vmem:[%s306 + $0x30] sm:$0xff] %vm344, %v1968
      %2001 = vst.msk [vmem:[%s306 + $0x38] sm:$0xff] %vm344, %v1969
      %2002 = vst.msk [vmem:[%s306 + $0x40] sm:$0xff] %vm344, %v1970
      %2003 = vst.msk [vmem:[%s306 + $0x48] sm:$0xff] %vm344, %v1971
      %2004 = vst.msk [vmem:[%s306 + $0x50] sm:$0xff] %vm344, %v1972
      %2005 = vst.msk [vmem:[%s306 + $0x58] sm:$0xff] %vm344, %v1973
      %2006 = vst.msk [vmem:[%s306 + $0x60] sm:$0xff] %vm344, %v1974
      %2007 = vst.msk [vmem:[%s306 + $0x68] sm:$0xff] %vm344, %v1975
      %2008 = vst.msk [vmem:[%s306 + $0x70] sm:$0xff] %vm344, %v1976
      %2009 = vst.msk [vmem:[%s306 + $0x78] sm:$0xff] %vm344, %v1977
      %2010 = vst.msk [vmem:[%s306 + $0x80] sm:$0xff] %vm344, %v1978
      %2011 = vst.msk [vmem:[%s306 + $0x88] sm:$0xff] %vm344, %v1979
      %2012 = vst.msk [vmem:[%s306 + $0x90] sm:$0xff] %vm344, %v1980
      %2013 = vst.msk [vmem:[%s306 + $0x98] sm:$0xff] %vm344, %v1981
      %2014 = vst.msk [vmem:[%s306 + $0xa0] sm:$0xff] %vm344, %v1982
      %2015 = vst.msk [vmem:[%s306 + $0xa8] sm:$0xff] %vm344, %v1983
      %2016 = vst.msk [vmem:[%s306 + $0xb0] sm:$0xff] %vm344, %v1984
      %2017 = vst.msk [vmem:[%s306 + $0xb8] sm:$0xff] %vm344, %v1985
      %2018 = vst.msk [vmem:[%s306 + $0xc0] sm:$0xff] %vm344, %v1986
      %2019 = vst.msk [vmem:[%s306 + $0xc8] sm:$0xff] %vm344, %v1987
      %2020 = vst.msk [vmem:[%s306 + $0xd0] sm:$0xff] %vm344, %v1988
      %2021 = vst.msk [vmem:[%s306 + $0xd8] sm:$0xff] %vm344, %v1989
      %2022 = vst.msk [vmem:[%s306 + $0xe0] sm:$0xff] %vm344, %v1990
      %2023 = vst.msk [vmem:[%s306 + $0xe8] sm:$0xff] %vm344, %v1991
      %2024 = vst.msk [vmem:[%s306 + $0xf0] sm:$0xff] %vm344, %v1992
      %2025 = vst.msk [vmem:[%s306 + $0xf8] sm:$0xff] %vm344, %v1993
      %p2026 = scmp.lt.s32.totalorder %s20, 1
      %s2027 = scalar_select %p2026, %s20, 1
      %s2028 = smul.addr %s2027, 32
      %s2029 = smul.addr %s2028, 8
      %s2030 = scalar_lea.vmem %s8, %s2029
      // Predicated region
      $region53: #{up_forward.5} parent=51 // pred_check
        %p2031 = pneg %p211
      $region54: #{up_forward.5} parent=51 // pred_check_branch
        %2033 = sbr.rel (%p2031) target = $region56
      $region55: #{up_forward.5} parent=51 // pred_region
        _
      $region56: #{up_forward.5} parent=51 // pred_fallthru
        _
    $region52: #{up_forward.5} parent=5 // pred_fallthru
      _
    %p2034 = scmp.le.s32.totalorder 2, %s15
    // Predicated region
    $region57: #{up_forward.5} parent=5 // pred_check
      %p2035 = pneg %p2034
    $region58: #{up_forward.5} parent=5 // pred_check_branch
      %2037 = sbr.rel (%p2035) target = $region60
    $region59: #{up_forward.5} parent=5 // pred_region
      %s2038 = ssub.s32 %s15, 2
      // Predicated region
      $region61: #{up_forward.5} parent=59 // pred_check
        %p2039 = pneg %p217
      $region62: #{up_forward.5} parent=59 // pred_check_branch
        %2041 = sbr.rel (%p2039) target = $region64
      $region63: #{up_forward.5} parent=59 // pred_region
        %p2042 = scmp.lt.s32.totalorder %s21, 1
        %s2043 = scalar_select %p2042, %s21, 1
        %s2044 = smul.addr %s2043, 32
        %s2045 = smul.addr %s2044, 8
        %s2046 = scalar_lea.vmem %s8, %s2045
      $region64: #{up_forward.5} parent=59 // pred_fallthru
        _
    $region60: #{up_forward.5} parent=5 // pred_fallthru
      _
  $region6: #{up_forward.5} parent=0 // loop_footer
    %s19 = sadd.s32 1, %s15
  $region7: #{up_forward.5} parent=0 // loop_footer_branch
    %14 = sbr.rel target = $region3
  $region8: #{up_forward.5} parent=0 // loop_exit
    _

</llo_original>
